<compile_context>
chip_gen: v6e
topology: v6e:2x2x1
jax: 0.10.0
libtpu: 0.0.40
codegen_flags: <defaults>
</compile_context>

<pallas_src>
import numpy as np
import jax
import jax.numpy as jnp
from jax.experimental import pallas as pl
from jax.experimental.pallas import tpu as pltpu


# ----------------------------------------------------------------------------
# Generation-aware sizing helpers
# ----------------------------------------------------------------------------
def _vmem_capacity_bytes():
    try:
        return int(pltpu.get_tpu_info().vmem_capacity_bytes)
    except Exception:
        return 64 << 20          # v7x floor (v5e/v6e have 128 MiB)


def _target_chunk_lanes():
    # 256-lane adjacency tiles fill a v6e/v7x MXU pass; on v5e (4x128^2 MXU)
    # a larger kron chunk only adds zero-padding work, so stay at 128.
    try:
        kind = jax.devices()[0].device_kind.lower()
        if any(t in kind for t in ("v2", "v3", "v4", "v5")):
            return 128
    except Exception:
        pass
    return 256


def _divisors(n):
    return [d for d in range(1, n + 1) if n % d == 0]


def _choose_chunk_frames(T, V, target_lanes):
    """Frames per adjacency chunk.  A_blk = kron(I_f, A) is a FIXED (f*V, f*V)
    tile -- it does NOT grow with the lane block, so the kron waste factor is
    capped at f instead of scaling with the whole tile."""
    cands = [f for f in _divisors(T) if f * V <= target_lanes]
    if not cands:
        return 1
    dense = [f for f in cands if (f * V) % 128 == 0]
    return max(dense) if dense else max(cands)


def _choose_lane_block(TV, chunk, max_c, budget_bytes, cap_lanes=2048):
    """Largest multiple of `chunk` dividing T*V (<= 2048 lanes) whose working
    set (double-buffered in/out tiles + f32 intermediates) fits the budget."""
    best = chunk
    for d in sorted(_divisors(TV // chunk)):
        lb = d * chunk
        if lb > cap_lanes:
            break
        if (2 + 2 + 3) * max_c * lb * 4 <= budget_bytes:
            best = lb
    return best


def _choose_samples_per_step(N, Lb, max_c, budget_bytes, max_nb=8):
    """Samples per grid step: big enough to amortize the ~0.35us/step pipeline
    overhead (target >= 512 lanes of work per step) while keeping >= 2 grid
    steps so the 'parallel' axis can still feed both TensorCores."""
    fits = [d for d in _divisors(N)
            if d <= max_nb and (2 + 2 + 3) * d * max_c * Lb * 4 <= budget_bytes]
    if not fits:
        return 1
    multi = [d for d in fits if N // d >= 2]
    pick = multi if multi else fits
    for d in sorted(pick):
        if d * Lb >= 512:
            return d
    return max(pick)


def _forward_vmem_estimate(Nb, C_in, C_out, max_c, Lb, chunk, layer_params):
    """Honest per-step estimate: double-buffered in/out tiles, pooled
    accumulator, A_blk, resident weights, and live f32 intermediates."""
    est = 2 * Nb * C_in * Lb * 4            # input activation tile (x2 buffers)
    est += 2 * Nb * C_out * Lb * 4          # output activation tile (x2 buffers)
    est += 2 * Nb * C_out * 4               # pooled accumulator tile
    est += 2 * chunk * chunk * 4            # block-diagonal adjacency
    est += sum(2 * (int(np.prod(W.shape)) + int(np.prod(b.shape))) * 4
               for W, b in layer_params)
    est += 4 * Nb * max_c * Lb * 4          # f32 intermediates / spill headroom
    return int(est)


# ----------------------------------------------------------------------------
# Fused forward kernel: all GCN layers + global-pooling epilogue in one call.
#   x_ref      : (Nb, C_in, Lb)   Nb samples, Lb lanes of the flattened (T,V) axis
#   refs       : W_0, b_0, ..., W_{L-1}, b_{L-1}, A_blk, y_ref, pooled_ref
#   A_blk      : (chunk, chunk) = kron(I_f, A), fixed size
#   y_ref      : (Nb, C_out, Lb)
#   pooled_ref : (Nb, C_out, 1)  sum over (T,V), accumulated across lane blocks
# ----------------------------------------------------------------------------
def _make_fused_gfe_kernel(num_layers, nb, chunk, compute_dtype):
    def graph(z, A):
        # Apply the fixed (chunk, chunk) block-diagonal adjacency to each
        # `chunk`-lane slab of z: (c, Lb) -> (c, Lb), f32 accumulation.
        lb = z.shape[-1]
        if lb == chunk:
            return jnp.dot(z, A, preferred_element_type=jnp.float32)
        outs = []
        for j in range(lb // chunk):
            outs.append(jnp.dot(z[:, j * chunk:(j + 1) * chunk], A,
                                preferred_element_type=jnp.float32))
        return jnp.concatenate(outs, axis=-1)

    def kernel(x_ref, *refs):
        a_ref = refs[2 * num_layers]
        y_ref = refs[2 * num_layers + 1]
        pooled_ref = refs[2 * num_layers + 2]

        A = a_ref[...].astype(compute_dtype)                      # (chunk, chunk)
        Ws = [refs[2 * l][...] for l in range(num_layers)]        # f32 weights
        bs = [refs[2 * l + 1][...] for l in range(num_layers)]    # (C_out, 1) f32

        @pl.when(pl.program_id(1) == 0)
        def _():
            pooled_ref[...] = jnp.zeros_like(pooled_ref)

        # TODO(synk): for very large channel counts, stage the inter-layer
        # activation through a VMEM scratch / chunk the channel axis at 128 to
        # bound vreg pressure; unnecessary at these sizes.
        for s in range(nb):
            x = x_ref[s].astype(compute_dtype)                    # (C_l, Lb)
            x32 = None
            for l in range(num_layers):
                W, b = Ws[l], bs[l]
                c_out, c_in = W.shape
                if c_in <= c_out:
                    # Associativity: graph multiply at the SMALLER channel count.
                    g = graph(x, A).astype(compute_dtype)         # (c_in, Lb)
                    y = jnp.dot(W.astype(compute_dtype), g,
                                preferred_element_type=jnp.float32)
                else:
                    h = jnp.dot(W.astype(compute_dtype), x,
                                preferred_element_type=jnp.float32)
                    y = graph(h.astype(compute_dtype), A)
                x32 = jnp.maximum(y + b, 0.0)                     # bias+ReLU in f32
                x = x32.astype(compute_dtype)
            y_ref[s] = x32.astype(y_ref.dtype)
            pooled_ref[s, :, :] = pooled_ref[s, :, :] + jnp.sum(
                x32, axis=-1, keepdims=True)

    return kernel


def gfe_forward_fused(x_nchw, layer_params, A, *, compute_dtype=jnp.float32):
    """x: (N, C_in, T, V), A: (V, V) -> (y: (N, C_out, T, V),
    pooled_mean: (N, C_out) = mean of y over (T, V), computed in the epilogue
    so predict never has to re-read the full activation from HBM)."""
    N, C_in, T, V = x_nchw.shape
    num_layers = len(layer_params)
    C_out = layer_params[-1][0].shape[0]
    max_c = max([C_in] + [W.shape[0] for W, _ in layer_params])
    TV = T * V

    cap = _vmem_capacity_bytes()
    budget = int(cap * 0.40)
    f = _choose_chunk_frames(T, V, _target_chunk_lanes())
    chunk = f * V
    Lb = _choose_lane_block(TV, chunk, max_c, budget)
    Nb = _choose_samples_per_step(N, Lb, max_c, budget)
    nt = TV // Lb

    x_flat = x_nchw.reshape(N, C_in, TV)                  # free reshape, stays NCHW
    a_blk = jnp.kron(jnp.eye(f, dtype=A.dtype), A)        # fixed (chunk, chunk)

    operands = [x_flat]
    in_specs = [pl.BlockSpec((Nb, C_in, Lb), lambda i, j: (i, 0, j))]
    for W, b in layer_params:
        operands += [W, b]
        in_specs += [pl.BlockSpec(W.shape, lambda i, j: (0, 0)),
                     pl.BlockSpec(b.shape, lambda i, j: (0, 0))]
    operands.append(a_blk)
    in_specs.append(pl.BlockSpec(a_blk.shape, lambda i, j: (0, 0)))

    est = _forward_vmem_estimate(Nb, C_in, C_out, max_c, Lb, chunk, layer_params)
    vmem_limit = int(min(max(4 * est, 32 << 20), int(cap * 0.7)))

    y, pooled = pl.pallas_call(
        _make_fused_gfe_kernel(num_layers, Nb, chunk, compute_dtype),
        out_shape=(jax.ShapeDtypeStruct((N, C_out, TV), x_nchw.dtype),
                   jax.ShapeDtypeStruct((N, C_out, 1), jnp.float32)),
        grid=(N // Nb, nt),
        in_specs=in_specs,
        out_specs=(pl.BlockSpec((Nb, C_out, Lb), lambda i, j: (i, 0, j)),
                   pl.BlockSpec((Nb, C_out, 1), lambda i, j: (i, 0, 0))),
        compiler_params=pltpu.CompilerParams(
            dimension_semantics=("parallel", "arbitrary"),
            vmem_limit_bytes=vmem_limit),
    )(*operands)
    return y.reshape(N, C_out, T, V), pooled[:, :, 0] / float(TV)


# ----------------------------------------------------------------------------
# Standalone predict kernel (spec API: takes the full activation).  Mb groups
# per grid step; pooling is the cheap reduce (sum THEN tiny matmul), the fc
# weight arrives pre-folded with the person & spatial means, and the store is
# (Mb, K) per step instead of a 1-lane (1, K, 1) write.
#   x_ref: (Mb, P*C, TV)   wgt_ref: (P*C, K)   b_ref: (1, K)   o_ref: (Mb, K)
# ----------------------------------------------------------------------------
def _predict_kernel(x_ref, wgt_ref, b_ref, o_ref):
    pooled = jnp.sum(x_ref[...].astype(jnp.float32), axis=-1)            # (Mb, PC)
    logits = jnp.dot(pooled, wgt_ref[...], preferred_element_type=jnp.float32)
    o_ref[...] = (logits + b_ref[...]).astype(o_ref.dtype)


# ----------------------------------------------------------------------------
# Module wrapper (parameter container + forward / predict, NCHW interface).
# ----------------------------------------------------------------------------
class BaseGFEPallas:
    def __init__(self, layer_channels, num_person, num_classes, out_channels, key,
                 compute_dtype=jnp.float32):
        assert layer_channels[-1] == out_channels
        self.num_person = num_person
        self.num_classes = num_classes
        self.out_channels = out_channels
        self.compute_dtype = compute_dtype

        keys = jax.random.split(key, 2 * (len(layer_channels) - 1) + 2)
        self.layer_params = []
        ki = 0
        for c_in, c_out in zip(layer_channels[:-1], layer_channels[1:]):
            W = jax.random.normal(keys[ki], (c_out, c_in), jnp.float32) * 0.2
            b = jax.random.normal(keys[ki + 1], (c_out, 1), jnp.float32) * 0.05
            self.layer_params.append((W, b))
            ki += 2
        # fc = nn.Conv2d(out_channels, num_classes, kernel_size=1) on 1x1 spatial
        self.fc_w = jax.random.normal(keys[ki], (num_classes, out_channels),
                                      jnp.float32) * 0.2
        self.fc_b = jax.random.normal(keys[ki + 1], (num_classes,), jnp.float32) * 0.05
        # Person averaging folded into the fc weight once:
        #   wg_base[k, p*C + c] = fc_w[k, c] / num_person
        self.wg_base = jnp.tile(self.fc_w, (1, num_person)) / num_person   # (K, P*C)

    # ---- forward: x (N, C, T, V), A (V, V) -> (N, out_channels, T, V) ----
    def forward(self, x_nchw, A):
        y, _ = self.forward_with_pool(x_nchw, A)
        return y

    # ---- fused path: also returns the (N, C_out) spatial mean from the epilogue
    def forward_with_pool(self, x_nchw, A):
        return gfe_forward_fused(x_nchw, self.layer_params, A,
                                 compute_dtype=self.compute_dtype)

    # ---- predict on the fused pooled output: plain XLA, no HBM re-read ----
    def predict_from_pooled(self, pooled_mean):
        P, C = self.num_person, self.out_channels
        grouped = pooled_mean.reshape(-1, P, C).mean(axis=1)     # person mean
        return grouped @ self.fc_w.T + self.fc_b

    # ---- predict (spec API): x (N, C_out, T, V) -> (N // num_person, K) ----
    # NOTE: assumes persons of the same action are contiguous along N (person
    # index minor), matching the PyTorch reference's .view grouping.
    def predict(self, x_nchw):
        N, C, T, V = x_nchw.shape
        P = self.num_person
        assert C == self.out_channels and N % P == 0
        M = N // P
        K = self.num_classes
        TV = T * V

        xg = x_nchw.reshape(M, P * C, TV)            # free reshape: persons stack on C
        wgt = (self.wg_base / TV).T                  # (P*C, K), spatial mean folded in
        b_row = self.fc_b.reshape(1, K)
        Mb = max(d for d in _divisors(M) if d <= 8)

        out = pl.pallas_call(
            _predict_kernel,
            out_shape=jax.ShapeDtypeStruct((M, K), jnp.float32),
            grid=(M // Mb,),
            in_specs=[
                pl.BlockSpec((Mb, P * C, TV), lambda m: (m, 0, 0)),
                pl.BlockSpec(wgt.shape, lambda m: (0, 0)),
                pl.BlockSpec(b_row.shape, lambda m: (0, 0)),
            ],
            out_specs=pl.BlockSpec((Mb, K), lambda m: (m, 0)),
            compiler_params=pltpu.CompilerParams(dimension_semantics=("parallel",)),
        )(xg, wgt, b_row)
        return out


# ----------------------------------------------------------------------------
# Pure-JAX references (match PyTorch semantics).
# ----------------------------------------------------------------------------
def forward_ref(model, x, A):
    for W, b in model.layer_params:
        h = jnp.einsum("oc,nctv->notv", W, x)
        g = jnp.einsum("notv,vw->notw", h, A)
        x = jnp.maximum(g + b.reshape(1, -1, 1, 1), 0.0)
    return x


def predict_ref(model, x):
    N = x.shape[0]
    P = model.num_person
    pooled = x.mean(axis=(2, 3))                                # avg_pool2d full spatial
    grouped = pooled.reshape(N // P, P, -1).mean(axis=1)        # person mean
    return grouped @ model.fc_w.T + model.fc_b                  # 1x1 conv fc, flattened


if __name__ == "__main__":
    key = jax.random.PRNGKey(0)
    k_x, k_a, k_p = jax.random.split(key, 3)

    # Small shapes: 2 actions * 2 persons = 4, C_in=4, T=8 frames, V=16 joints.
    N, C_in, T, V = 4, 4, 8, 16
    num_person, num_classes, out_channels = 2, 6, 32
    layer_channels = [C_in, 16, out_channels]     # two synthetic GCN layers

    x = jax.random.normal(k_x, (N, C_in, T, V), jnp.float32)
    A = jax.random.uniform(k_a, (V, V), jnp.float32)
    A = A / jnp.sum(A, axis=1, keepdims=True)     # row-normalized adjacency

    model = BaseGFEPallas(layer_channels, num_person, num_classes, out_channels, k_p)

    y, pooled_mean = model.forward_with_pool(x, A)
    y = jax.block_until_ready(y)
    y_ref = forward_ref(model, x, A)
    np.testing.assert_allclose(np.asarray(y), np.asarray(y_ref), rtol=1e-4, atol=1e-4)

    p_ref = predict_ref(model, y_ref)

    # Standalone predict (spec API, re-reads the activation).
    p1 = jax.block_until_ready(model.predict(y))
    np.testing.assert_allclose(np.asarray(p1), np.asarray(p_ref), rtol=1e-4, atol=1e-4)

    # Fused path: predict from the pooled epilogue output -- no HBM re-read.
    p2 = jax.block_until_ready(model.predict_from_pooled(pooled_mean))
    np.testing.assert_allclose(np.asarray(p2), np.asarray(p_ref), rtol=1e-4, atol=1e-4)

    print("KERNEL_OK")
</pallas_src>

<mosaic_0001>
module attributes {stable_mosaic.version = 11 : i64} {
  func.func @kernel(%arg0: i32, %arg1: i32, %arg2: memref<2x4x128xf32, #tpu.memory_space<vmem>>, %arg3: memref<16x4xf32, #tpu.memory_space<vmem>>, %arg4: memref<16x1xf32, #tpu.memory_space<vmem>>, %arg5: memref<32x16xf32, #tpu.memory_space<vmem>>, %arg6: memref<32x1xf32, #tpu.memory_space<vmem>>, %arg7: memref<128x128xf32, #tpu.memory_space<vmem>>, %arg8: memref<2x32x128xf32, #tpu.memory_space<vmem>>, %arg9: memref<2x32x1xf32, #tpu.memory_space<vmem>>) attributes {dimension_semantics = [#tpu.dimension_semantics<parallel>, #tpu.dimension_semantics<arbitrary>], iteration_bounds = array<i64: 2, 1>, scalar_prefetch = 0 : i64, scratch_operands = 0 : i64, tpu.core_type = #tpu.core_type<tc>, window_params = [{transform_indices = @transform_0, window_bounds = array<i64: 2, 4, 128>}, {pipeline_mode = #tpu.pipeline_mode<synchronous>, transform_indices = @transform_1, window_bounds = array<i64: 16, 4>}, {pipeline_mode = #tpu.pipeline_mode<synchronous>, transform_indices = @transform_2, window_bounds = array<i64: 16, 1>}, {pipeline_mode = #tpu.pipeline_mode<synchronous>, transform_indices = @transform_3, window_bounds = array<i64: 32, 16>}, {pipeline_mode = #tpu.pipeline_mode<synchronous>, transform_indices = @transform_4, window_bounds = array<i64: 32, 1>}, {pipeline_mode = #tpu.pipeline_mode<synchronous>, transform_indices = @transform_5, window_bounds = array<i64: 128, 128>}, {transform_indices = @transform_6, window_bounds = array<i64: 2, 32, 128>}, {transform_indices = @transform_7, window_bounds = array<i64: 2, 32, 1>}]} {
    %c0 = arith.constant 0 : index
    %c0_0 = arith.constant 0 : index
    %0 = vector.load %arg7[%c0, %c0_0] : memref<128x128xf32, #tpu.memory_space<vmem>>, vector<128x128xf32>
    %c0_1 = arith.constant 0 : index
    %c0_2 = arith.constant 0 : index
    %1 = vector.load %arg3[%c0_1, %c0_2] : memref<16x4xf32, #tpu.memory_space<vmem>>, vector<16x4xf32>
    %c0_3 = arith.constant 0 : index
    %c0_4 = arith.constant 0 : index
    %2 = vector.load %arg5[%c0_3, %c0_4] : memref<32x16xf32, #tpu.memory_space<vmem>>, vector<32x16xf32>
    %c0_5 = arith.constant 0 : index
    %c0_6 = arith.constant 0 : index
    %3 = vector.load %arg4[%c0_5, %c0_6] : memref<16x1xf32, #tpu.memory_space<vmem>>, vector<16x1xf32>
    %c0_7 = arith.constant 0 : index
    %c0_8 = arith.constant 0 : index
    %4 = vector.load %arg6[%c0_7, %c0_8] : memref<32x1xf32, #tpu.memory_space<vmem>>, vector<32x1xf32>
    %c0_i32 = arith.constant 0 : i32
    %5 = arith.cmpi eq, %arg1, %c0_i32 : i32
    %6 = arith.extui %5 : i1 to i32
    %c0_i32_9 = arith.constant 0 : i32
    %7 = arith.cmpi ne, %6, %c0_i32_9 : i32
    scf.if %7 {
      %cst_46 = arith.constant 0.000000e+00 : f32
      %58 = vector.broadcast %cst_46 : f32 to vector<2x32x1xf32>
      %c0_47 = arith.constant 0 : index
      %c0_48 = arith.constant 0 : index
      %c0_49 = arith.constant 0 : index
      %59 = vector.load %arg9[%c0_47, %c0_48, %c0_49] : memref<2x32x1xf32, #tpu.memory_space<vmem>>, vector<2x32x1xf32>
      tpu.vector_store %arg9[%c0_47, %c0_48, %c0_49], %58 {strides = array<i32>} : memref<2x32x1xf32, #tpu.memory_space<vmem>>, vector<2x32x1xf32>,
    } else {
    }
    %c0_10 = arith.constant 0 : index
    %c0_11 = arith.constant 0 : index
    %c0_12 = arith.constant 0 : index
    %8 = vector.load %arg2[%c0_10, %c0_11, %c0_12] : memref<2x4x128xf32, #tpu.memory_space<vmem>>, vector<1x4x128xf32>
    %9 = vector.shape_cast %8 : vector<1x4x128xf32> to vector<4x128xf32>
    %cst = arith.constant dense<0.000000e+00> : vector<4x128xf32>
    %10 = tpu.matmul %9, %0, %cst {dimension_numbers = #tpu.dot_dimension_numbers<[1], [0], [0], [1], [0, 0, 1, 1], [], []>} : vector<4x128xf32>, vector<128x128xf32>, vector<4x128xf32> -> vector<4x128xf32>
    %cst_13 = arith.constant dense<0.000000e+00> : vector<16x128xf32>
    %11 = tpu.matmul %1, %10, %cst_13 {dimension_numbers = #tpu.dot_dimension_numbers<[1], [0], [0], [1], [0, 0, 1, 1], [], []>} : vector<16x4xf32>, vector<4x128xf32>, vector<16x128xf32> -> vector<16x128xf32>
    %12 = vector.broadcast %3 : vector<16x1xf32> to vector<16x128xf32>
    %13 = arith.addf %11, %12 : vector<16x128xf32>
    %cst_14 = arith.constant 0.000000e+00 : f32
    %14 = vector.broadcast %cst_14 : f32 to vector<16x128xf32>
    %15 = arith.maximumf %13, %14 : vector<16x128xf32>
    %cst_15 = arith.constant dense<0.000000e+00> : vector<16x128xf32>
    %16 = tpu.matmul %15, %0, %cst_15 {dimension_numbers = #tpu.dot_dimension_numbers<[1], [0], [0], [1], [0, 0, 1, 1], [], []>} : vector<16x128xf32>, vector<128x128xf32>, vector<16x128xf32> -> vector<16x128xf32>
    %cst_16 = arith.constant dense<0.000000e+00> : vector<32x128xf32>
    %17 = tpu.matmul %2, %16, %cst_16 {dimension_numbers = #tpu.dot_dimension_numbers<[1], [0], [0], [1], [0, 0, 1, 1], [], []>} : vector<32x16xf32>, vector<16x128xf32>, vector<32x128xf32> -> vector<32x128xf32>
    %18 = vector.broadcast %4 : vector<32x1xf32> to vector<32x128xf32>
    %19 = arith.addf %17, %18 : vector<32x128xf32>
    %cst_17 = arith.constant 0.000000e+00 : f32
    %20 = vector.broadcast %cst_17 : f32 to vector<32x128xf32>
    %21 = arith.maximumf %19, %20 : vector<32x128xf32>
    %c0_18 = arith.constant 0 : index
    %c0_19 = arith.constant 0 : index
    %c0_20 = arith.constant 0 : index
    %22 = vector.load %arg8[%c0_18, %c0_19, %c0_20] : memref<2x32x128xf32, #tpu.memory_space<vmem>>, vector<1x32x128xf32>
    %23 = vector.shape_cast %22 : vector<1x32x128xf32> to vector<32x128xf32>
    %24 = vector.shape_cast %21 : vector<32x128xf32> to vector<1x32x128xf32>
    tpu.vector_store %arg8[%c0_18, %c0_19, %c0_20], %24 {strides = array<i32>} : memref<2x32x128xf32, #tpu.memory_space<vmem>>, vector<1x32x128xf32>,
    %c0_21 = arith.constant 0 : index
    %c0_22 = arith.constant 0 : index
    %c0_23 = arith.constant 0 : index
    %25 = vector.load %arg9[%c0_21, %c0_22, %c0_23] : memref<2x32x1xf32, #tpu.memory_space<vmem>>, vector<1x32x1xf32>
    %26 = vector.shape_cast %25 : vector<1x32x1xf32> to vector<32x1xf32>
    %cst_24 = arith.constant dense<0.000000e+00> : vector<32xf32>
    %27 = vector.multi_reduction <add>, %21, %cst_24 [1] : vector<32x128xf32> to vector<32xf32>
    %28 = vector.shape_cast %27 : vector<32xf32> to vector<32x1xf32>
    %29 = arith.addf %26, %28 : vector<32x1xf32>
    %c0_25 = arith.constant 0 : index
    %c0_26 = arith.constant 0 : index
    %c0_27 = arith.constant 0 : index
    %30 = vector.load %arg9[%c0_25, %c0_26, %c0_27] : memref<2x32x1xf32, #tpu.memory_space<vmem>>, vector<1x32x1xf32>
    %31 = vector.shape_cast %30 : vector<1x32x1xf32> to vector<32x1xf32>
    %32 = vector.shape_cast %29 : vector<32x1xf32> to vector<1x32x1xf32>
    tpu.vector_store %arg9[%c0_25, %c0_26, %c0_27], %32 {strides = array<i32>} : memref<2x32x1xf32, #tpu.memory_space<vmem>>, vector<1x32x1xf32>,
    %c1 = arith.constant 1 : index
    %c0_28 = arith.constant 0 : index
    %c0_29 = arith.constant 0 : index
    %33 = vector.load %arg2[%c1, %c0_28, %c0_29] : memref<2x4x128xf32, #tpu.memory_space<vmem>>, vector<1x4x128xf32>
    %34 = vector.shape_cast %33 : vector<1x4x128xf32> to vector<4x128xf32>
    %cst_30 = arith.constant dense<0.000000e+00> : vector<4x128xf32>
    %35 = tpu.matmul %34, %0, %cst_30 {dimension_numbers = #tpu.dot_dimension_numbers<[1], [0], [0], [1], [0, 0, 1, 1], [], []>} : vector<4x128xf32>, vector<128x128xf32>, vector<4x128xf32> -> vector<4x128xf32>
    %cst_31 = arith.constant dense<0.000000e+00> : vector<16x128xf32>
    %36 = tpu.matmul %1, %35, %cst_31 {dimension_numbers = #tpu.dot_dimension_numbers<[1], [0], [0], [1], [0, 0, 1, 1], [], []>} : vector<16x4xf32>, vector<4x128xf32>, vector<16x128xf32> -> vector<16x128xf32>
    %37 = vector.broadcast %3 : vector<16x1xf32> to vector<16x128xf32>
    %38 = arith.addf %36, %37 : vector<16x128xf32>
    %cst_32 = arith.constant 0.000000e+00 : f32
    %39 = vector.broadcast %cst_32 : f32 to vector<16x128xf32>
    %40 = arith.maximumf %38, %39 : vector<16x128xf32>
    %cst_33 = arith.constant dense<0.000000e+00> : vector<16x128xf32>
    %41 = tpu.matmul %40, %0, %cst_33 {dimension_numbers = #tpu.dot_dimension_numbers<[1], [0], [0], [1], [0, 0, 1, 1], [], []>} : vector<16x128xf32>, vector<128x128xf32>, vector<16x128xf32> -> vector<16x128xf32>
    %cst_34 = arith.constant dense<0.000000e+00> : vector<32x128xf32>
    %42 = tpu.matmul %2, %41, %cst_34 {dimension_numbers = #tpu.dot_dimension_numbers<[1], [0], [0], [1], [0, 0, 1, 1], [], []>} : vector<32x16xf32>, vector<16x128xf32>, vector<32x128xf32> -> vector<32x128xf32>
    %43 = vector.broadcast %4 : vector<32x1xf32> to vector<32x128xf32>
    %44 = arith.addf %42, %43 : vector<32x128xf32>
    %cst_35 = arith.constant 0.000000e+00 : f32
    %45 = vector.broadcast %cst_35 : f32 to vector<32x128xf32>
    %46 = arith.maximumf %44, %45 : vector<32x128xf32>
    %c1_36 = arith.constant 1 : index
    %c0_37 = arith.constant 0 : index
    %c0_38 = arith.constant 0 : index
    %47 = vector.load %arg8[%c1_36, %c0_37, %c0_38] : memref<2x32x128xf32, #tpu.memory_space<vmem>>, vector<1x32x128xf32>
    %48 = vector.shape_cast %47 : vector<1x32x128xf32> to vector<32x128xf32>
    %49 = vector.shape_cast %46 : vector<32x128xf32> to vector<1x32x128xf32>
    tpu.vector_store %arg8[%c1_36, %c0_37, %c0_38], %49 {strides = array<i32>} : memref<2x32x128xf32, #tpu.memory_space<vmem>>, vector<1x32x128xf32>,
    %c1_39 = arith.constant 1 : index
    %c0_40 = arith.constant 0 : index
    %c0_41 = arith.constant 0 : index
    %50 = vector.load %arg9[%c1_39, %c0_40, %c0_41] : memref<2x32x1xf32, #tpu.memory_space<vmem>>, vector<1x32x1xf32>
    %51 = vector.shape_cast %50 : vector<1x32x1xf32> to vector<32x1xf32>
    %cst_42 = arith.constant dense<0.000000e+00> : vector<32xf32>
    %52 = vector.multi_reduction <add>, %46, %cst_42 [1] : vector<32x128xf32> to vector<32xf32>
    %53 = vector.shape_cast %52 : vector<32xf32> to vector<32x1xf32>
    %54 = arith.addf %51, %53 : vector<32x1xf32>
    %c1_43 = arith.constant 1 : index
    %c0_44 = arith.constant 0 : index
    %c0_45 = arith.constant 0 : index
    %55 = vector.load %arg9[%c1_43, %c0_44, %c0_45] : memref<2x32x1xf32, #tpu.memory_space<vmem>>, vector<1x32x1xf32>
    %56 = vector.shape_cast %55 : vector<1x32x1xf32> to vector<32x1xf32>
    %57 = vector.shape_cast %54 : vector<32x1xf32> to vector<1x32x1xf32>
    tpu.vector_store %arg9[%c1_43, %c0_44, %c0_45], %57 {strides = array<i32>} : memref<2x32x1xf32, #tpu.memory_space<vmem>>, vector<1x32x1xf32>,
    return
  }
  func.func @transform_0(%arg0: i32, %arg1: i32) -> (i32, i32, i32) {
    %c0_i32 = arith.constant 0 : i32
    %c0_i32_0 = arith.constant 0 : i32
    return %arg0, %c0_i32, %arg1 : i32, i32, i32
  }
  func.func @transform_1(%arg0: i32, %arg1: i32) -> (i32, i32) {
    %c0_i32 = arith.constant 0 : i32
    %c0_i32_0 = arith.constant 0 : i32
    %c0_i32_1 = arith.constant 0 : i32
    return %c0_i32, %c0_i32_0 : i32, i32
  }
  func.func @transform_2(%arg0: i32, %arg1: i32) -> (i32, i32) {
    %c0_i32 = arith.constant 0 : i32
    %c0_i32_0 = arith.constant 0 : i32
    %c0_i32_1 = arith.constant 0 : i32
    return %c0_i32, %c0_i32_0 : i32, i32
  }
  func.func @transform_3(%arg0: i32, %arg1: i32) -> (i32, i32) {
    %c0_i32 = arith.constant 0 : i32
    %c0_i32_0 = arith.constant 0 : i32
    %c0_i32_1 = arith.constant 0 : i32
    return %c0_i32, %c0_i32_0 : i32, i32
  }
  func.func @transform_4(%arg0: i32, %arg1: i32) -> (i32, i32) {
    %c0_i32 = arith.constant 0 : i32
    %c0_i32_0 = arith.constant 0 : i32
    %c0_i32_1 = arith.constant 0 : i32
    return %c0_i32, %c0_i32_0 : i32, i32
  }
  func.func @transform_5(%arg0: i32, %arg1: i32) -> (i32, i32) {
    %c0_i32 = arith.constant 0 : i32
    %c0_i32_0 = arith.constant 0 : i32
    %c0_i32_1 = arith.constant 0 : i32
    return %c0_i32, %c0_i32_0 : i32, i32
  }
  func.func @transform_6(%arg0: i32, %arg1: i32) -> (i32, i32, i32) {
    %c0_i32 = arith.constant 0 : i32
    %c0_i32_0 = arith.constant 0 : i32
    return %arg0, %c0_i32, %arg1 : i32, i32, i32
  }
  func.func @transform_7(%arg0: i32, %arg1: i32) -> (i32, i32, i32) {
    %c0_i32 = arith.constant 0 : i32
    %c0_i32_0 = arith.constant 0 : i32
    %c0_i32_1 = arith.constant 0 : i32
    return %arg0, %c0_i32, %c0_i32_0 : i32, i32, i32
  }
}

</mosaic_0001>

<llo_original>
// kernel: tpu_custom_call.1
$region0: #{tpu_custom_call.1}
  #allocation0 [shape = 'u32[]', space=smem, size = 0x4, offset = 0x4, fixed_abs, tag = 'smem constant byte address 0x4 - core index']
  #allocation1 [shape = 'u32[144,128]{1,0:T(1,128)}', space=vmem, size = 0x12000, scoped, tag = 'internal scratch']
  %s0 = inlined_call_operand.vmem [shape: f32[4,4,128], index: 0, kind: input, shape index: {}]
  %s1 = inlined_call_operand.vmem [shape: f32[16,4], index: 1, kind: input, shape index: {}]
  %s2 = inlined_call_operand.vmem [shape: f32[16,1], index: 2, kind: input, shape index: {}]
  %s3 = inlined_call_operand.vmem [shape: f32[32,16], index: 3, kind: input, shape index: {}]
  %s4 = inlined_call_operand.vmem [shape: f32[32,1], index: 4, kind: input, shape index: {}]
  %s5 = inlined_call_operand.hbm [shape: f32[128,128], index: 5, kind: input, shape index: {}]
  %s6 = inlined_call_operand.hbm [shape: f32[4,32,128], index: 6, kind: output, shape index: {0}]
  %s7 = inlined_call_operand.vmem [shape: f32[4,32,1], index: 7, kind: output, shape index: {1}]
  %8 = xla_tuple %s6, %s7
  %s9 = sld [smem:[#allocation0]]
  $region73: #{tpu_custom_call.1} parent=0
    _
  %s11 = ssub.s32 1, %s9
  %s12 = scalar_select 0, %s11, %s9
  $region1: #{tpu_custom_call.1} parent=0
    #allocation2 [shape = 'u8[65536]{0}', space=vmem, size = 0x10000, scoped, tag = 'input window, operand 5, single buffered']
    #allocation3 [shape = 's32[2]{0}', space=sflag, size = 0x8, scoped, tag = 'scoped memory for tpu_custom_call.1']
    #allocation4 [shape = 's32[2]{0}', space=sflag, size = 0x8, scoped, tag = 'scoped memory for tpu_custom_call.1']
    #allocation5 [shape = 'u8[65536]{0}', space=vmem, size = 0x10000, scoped, tag = 'output window, operand 0']
    %13 = vsyncpa [#allocation3], 0
    %14 = vsyncpa [#allocation4], 0
    %s15 = scalar_lea.sflag [#allocation4], 1
    %16 = vsyncpa %s15, 0
    loop: start=0, step=1, limit=4
    $region2: #{tpu_custom_call.1} parent=1 // loop_pre_header
      _
    $region3: #{tpu_custom_call.1} parent=1 // loop_header
      %s18 = sphi 0, %s22
      %p19 = scmp.ge.s32.totalorder %s18, 4
      %s25 = sphi 0, %s37
      %s26 = sphi 0, %s33
      %s27 = sphi 0, %s25
      %s28 = sphi 0, %s26
      %s29 = sphi 0, %s27
      %s30 = sphi 0, %s28
      %s42 = sphi 0, %s44
      %s45 = sphi 0, %s42
      %s46 = sphi 0, %s45
      %s62 = sphi 0, %s46
      %s66 = sphi 0, %s66
      %s68 = sphi 0, %s66
      %s69 = sphi 0, %s68
      %s83 = sphi 0, %s69
      %s87 = sphi 0, %s87
      %s89 = sphi 0, %s87
      %s90 = sphi 0, %s89
      %s104 = sphi 0, %s90
      %s108 = sphi 0, %s108
      %s110 = sphi 0, %s108
      %s111 = sphi 0, %s110
      %s125 = sphi 0, %s111
      %s129 = sphi 0, %s129
      %s131 = sphi 0, %s129
      %s132 = sphi 0, %s131
      %s146 = sphi 0, %s132
      %s150 = sphi 0, %s150
      %s152 = sphi 0, %s150
      %s153 = sphi 0, %s152
      %s167 = sphi 0, %s153
      %s175 = sphi 0, %s177
      %s178 = sphi 0, %s175
      %s179 = sphi 0, %s178
      %s195 = sphi 0, %s179
      %s201 = sphi 0, %s203
      %s204 = sphi 0, %s201
      %s205 = sphi 0, %s204
      %s221 = sphi 0, %s205
    $region4: #{tpu_custom_call.1} parent=1 // loop_header_branch
      %21 = sbr.rel (%p19) target = $region8
    $region5: #{tpu_custom_call.1} parent=1 // loop_body
      %s23 = ssub.s32 %s18, 1
      %s24 = ssub.s32 %s18, 2
      %s31 = sadd.s32 1, %s26
      %p32 = scmp.ge.s32.totalorder %s31, 1
      %s33 = scalar_select %p32, 0, %s31
      %s34 = sadd.s32 1, %s25
      %s35 = scalar_select %p32, %s34, %s25
      %p36 = scmp.ge.s32.totalorder %s35, 2
      %s37 = scalar_select %p36, 0, %s35
      %s38 = ssub.s32 %s25, %s37
      %s39 = ssub.s32 %s26, %s33
      %s40 = sor.u32 %s38, %s39
      %p41 = scmp.eq.s32.totalorder %s40, 0
      %s43 = sadd.s32 %s42, 1
      %s44 = scalar_select %p41, %s42, %s43
      %p47 = pneg %p41
      %p48 = scmp.eq.s32.totalorder %s18, 1
      %p49 = por %p47, %p48
      %p50 = scmp.ne.s32.totalorder %s42, %s45
      %p51 = scmp.eq.s32.totalorder %s18, 0
      %p52 = por %p50, %p51
      %p53 = scmp.ne.s32.totalorder %s42, %s45
      %p54 = scmp.eq.s32.totalorder %s23, 1
      %p55 = por %p53, %p54
      %p56 = scmp.ne.s32.totalorder %s45, %s46
      %p57 = scmp.eq.s32.totalorder %s23, 0
      %p58 = por %p56, %p57
      %p59 = scmp.ne.s32.totalorder %s45, %s46
      %p60 = scmp.eq.s32.totalorder %s24, 1
      %p61 = por %p59, %p60
      %p63 = scmp.ne.s32.totalorder %s46, %s62
      %p64 = scmp.eq.s32.totalorder %s24, 0
      %p65 = por %p63, %p64
      %s67 = sadd.s32 %s66, 1
      %p70 = scmp.eq.s32.totalorder %s18, 1
      %p71 = scmp.ne.s32.totalorder %s66, %s68
      %p72 = scmp.eq.s32.totalorder %s18, 0
      %p73 = por %p71, %p72
      %p74 = scmp.ne.s32.totalorder %s66, %s68
      %p75 = scmp.eq.s32.totalorder %s23, 1
      %p76 = por %p74, %p75
      %p77 = scmp.ne.s32.totalorder %s68, %s69
      %p78 = scmp.eq.s32.totalorder %s23, 0
      %p79 = por %p77, %p78
      %p80 = scmp.ne.s32.totalorder %s68, %s69
      %p81 = scmp.eq.s32.totalorder %s24, 1
      %p82 = por %p80, %p81
      %p84 = scmp.ne.s32.totalorder %s69, %s83
      %p85 = scmp.eq.s32.totalorder %s24, 0
      %p86 = por %p84, %p85
      %s88 = sadd.s32 %s87, 1
      %p91 = scmp.eq.s32.totalorder %s18, 1
      %p92 = scmp.ne.s32.totalorder %s87, %s89
      %p93 = scmp.eq.s32.totalorder %s18, 0
      %p94 = por %p92, %p93
      %p95 = scmp.ne.s32.totalorder %s87, %s89
      %p96 = scmp.eq.s32.totalorder %s23, 1
      %p97 = por %p95, %p96
      %p98 = scmp.ne.s32.totalorder %s89, %s90
      %p99 = scmp.eq.s32.totalorder %s23, 0
      %p100 = por %p98, %p99
      %p101 = scmp.ne.s32.totalorder %s89, %s90
      %p102 = scmp.eq.s32.totalorder %s24, 1
      %p103 = por %p101, %p102
      %p105 = scmp.ne.s32.totalorder %s90, %s104
      %p106 = scmp.eq.s32.totalorder %s24, 0
      %p107 = por %p105, %p106
      %s109 = sadd.s32 %s108, 1
      %p112 = scmp.eq.s32.totalorder %s18, 1
      %p113 = scmp.ne.s32.totalorder %s108, %s110
      %p114 = scmp.eq.s32.totalorder %s18, 0
      %p115 = por %p113, %p114
      %p116 = scmp.ne.s32.totalorder %s108, %s110
      %p117 = scmp.eq.s32.totalorder %s23, 1
      %p118 = por %p116, %p117
      %p119 = scmp.ne.s32.totalorder %s110, %s111
      %p120 = scmp.eq.s32.totalorder %s23, 0
      %p121 = por %p119, %p120
      %p122 = scmp.ne.s32.totalorder %s110, %s111
      %p123 = scmp.eq.s32.totalorder %s24, 1
      %p124 = por %p122, %p123
      %p126 = scmp.ne.s32.totalorder %s111, %s125
      %p127 = scmp.eq.s32.totalorder %s24, 0
      %p128 = por %p126, %p127
      %s130 = sadd.s32 %s129, 1
      %p133 = scmp.eq.s32.totalorder %s18, 1
      %p134 = scmp.ne.s32.totalorder %s129, %s131
      %p135 = scmp.eq.s32.totalorder %s18, 0
      %p136 = por %p134, %p135
      %p137 = scmp.ne.s32.totalorder %s129, %s131
      %p138 = scmp.eq.s32.totalorder %s23, 1
      %p139 = por %p137, %p138
      %p140 = scmp.ne.s32.totalorder %s131, %s132
      %p141 = scmp.eq.s32.totalorder %s23, 0
      %p142 = por %p140, %p141
      %p143 = scmp.ne.s32.totalorder %s131, %s132
      %p144 = scmp.eq.s32.totalorder %s24, 1
      %p145 = por %p143, %p144
      %p147 = scmp.ne.s32.totalorder %s132, %s146
      %p148 = scmp.eq.s32.totalorder %s24, 0
      %p149 = por %p147, %p148
      %s151 = sadd.s32 %s150, 1
      %p154 = scmp.eq.s32.totalorder %s18, 1
      %p155 = scmp.ne.s32.totalorder %s150, %s152
      %p156 = scmp.eq.s32.totalorder %s18, 0
      %p157 = por %p155, %p156
      %p158 = scmp.ne.s32.totalorder %s150, %s152
      %p159 = scmp.eq.s32.totalorder %s23, 1
      %p160 = por %p158, %p159
      %p161 = scmp.ne.s32.totalorder %s152, %s153
      %p162 = scmp.eq.s32.totalorder %s23, 0
      %p163 = por %p161, %p162
      %p164 = scmp.ne.s32.totalorder %s152, %s153
      %p165 = scmp.eq.s32.totalorder %s24, 1
      %p166 = por %p164, %p165
      %p168 = scmp.ne.s32.totalorder %s153, %s167
      %p169 = scmp.eq.s32.totalorder %s24, 0
      %p170 = por %p168, %p169
      %s171 = ssub.s32 %s25, %s37
      %s172 = ssub.s32 %s26, %s33
      %s173 = sor.u32 %s171, %s172
      %p174 = scmp.eq.s32.totalorder %s173, 0
      %s176 = sadd.s32 %s175, 1
      %s177 = scalar_select %p174, %s175, %s176
      %p180 = pneg %p174
      %p181 = scmp.eq.s32.totalorder %s18, 1
      %p182 = por %p180, %p181
      %p183 = scmp.ne.s32.totalorder %s175, %s178
      %p184 = scmp.eq.s32.totalorder %s18, 0
      %p185 = por %p183, %p184
      %p186 = scmp.ne.s32.totalorder %s175, %s178
      %p187 = scmp.eq.s32.totalorder %s23, 1
      %p188 = por %p186, %p187
      %p189 = scmp.ne.s32.totalorder %s178, %s179
      %p190 = scmp.eq.s32.totalorder %s23, 0
      %p191 = por %p189, %p190
      %p192 = scmp.ne.s32.totalorder %s178, %s179
      %p193 = scmp.eq.s32.totalorder %s24, 1
      %p194 = por %p192, %p193
      %p196 = scmp.ne.s32.totalorder %s179, %s195
      %p197 = scmp.eq.s32.totalorder %s24, 0
      %p198 = por %p196, %p197
      %s199 = ssub.s32 %s25, %s37
      %p200 = scmp.eq.s32.totalorder %s199, 0
      %s202 = sadd.s32 %s201, 1
      %s203 = scalar_select %p200, %s201, %s202
      %p206 = pneg %p200
      %p207 = scmp.eq.s32.totalorder %s18, 1
      %p208 = por %p206, %p207
      %p209 = scmp.ne.s32.totalorder %s201, %s204
      %p210 = scmp.eq.s32.totalorder %s18, 0
      %p211 = por %p209, %p210
      %p212 = scmp.ne.s32.totalorder %s201, %s204
      %p213 = scmp.eq.s32.totalorder %s23, 1
      %p214 = por %p212, %p213
      %p215 = scmp.ne.s32.totalorder %s204, %s205
      %p216 = scmp.eq.s32.totalorder %s23, 0
      %p217 = por %p215, %p216
      %p218 = scmp.ne.s32.totalorder %s204, %s205
      %p219 = scmp.eq.s32.totalorder %s24, 1
      %p220 = por %p218, %p219
      %p222 = scmp.ne.s32.totalorder %s205, %s221
      %p223 = scmp.eq.s32.totalorder %s24, 0
      %p224 = por %p222, %p223
      %p225 = scmp.le.s32.totalorder 1, %s18
      %p226 = scmp.lt.s32.totalorder %s18, 3
      %p227 = pnand %p225, %p226
      %p228 = pneg %p227
      // Predicated region
      $region9: #{tpu_custom_call.1} parent=5 // pred_check
        _
      $region10: #{tpu_custom_call.1} parent=5 // pred_check_branch
        %230 = sbr.rel (%p227) target = $region12
      $region11: #{tpu_custom_call.1} parent=5 // pred_region
        %s231 = ssub.s32 %s18, 1
        // Predicated region
        $region13: #{tpu_custom_call.1} parent=11 // pred_check
          %p232 = pneg %p79
        $region14: #{tpu_custom_call.1} parent=11 // pred_check_branch
          %234 = sbr.rel (%p232) target = $region16
        $region15: #{tpu_custom_call.1} parent=11 // pred_region
          _
        $region16: #{tpu_custom_call.1} parent=11 // pred_fallthru
          _
        // Predicated region
        $region17: #{tpu_custom_call.1} parent=11 // pred_check
          %p235 = pneg %p100
        $region18: #{tpu_custom_call.1} parent=11 // pred_check_branch
          %237 = sbr.rel (%p235) target = $region20
        $region19: #{tpu_custom_call.1} parent=11 // pred_region
          _
        $region20: #{tpu_custom_call.1} parent=11 // pred_fallthru
          _
        // Predicated region
        $region21: #{tpu_custom_call.1} parent=11 // pred_check
          %p238 = pneg %p121
        $region22: #{tpu_custom_call.1} parent=11 // pred_check_branch
          %240 = sbr.rel (%p238) target = $region24
        $region23: #{tpu_custom_call.1} parent=11 // pred_region
          _
        $region24: #{tpu_custom_call.1} parent=11 // pred_fallthru
          _
        // Predicated region
        $region25: #{tpu_custom_call.1} parent=11 // pred_check
          %p241 = pneg %p142
        $region26: #{tpu_custom_call.1} parent=11 // pred_check_branch
          %243 = sbr.rel (%p241) target = $region28
        $region27: #{tpu_custom_call.1} parent=11 // pred_region
          _
        $region28: #{tpu_custom_call.1} parent=11 // pred_fallthru
          _
        // Predicated region
        $region29: #{tpu_custom_call.1} parent=11 // pred_check
          %p244 = pneg %p163
        $region30: #{tpu_custom_call.1} parent=11 // pred_check_branch
          %246 = sbr.rel (%p244) target = $region32
        $region31: #{tpu_custom_call.1} parent=11 // pred_region
          %s248 = ssub.s32 2048, 2048
          %249 = vsyncadd [#allocation3], %s248
          %s250 = sshll.u32 [#allocation2], 4
          %s251 = int_to_ptr.vmem [resolvable:$true] %s250
          %256 = dma.hbm_to_vmem [thread:$0]  %s5, 2048, %s251, [#allocation3], 128, 128, 8
        $region32: #{tpu_custom_call.1} parent=11 // pred_fallthru
          _
      $region12: #{tpu_custom_call.1} parent=5 // pred_fallthru
        _
      %p257 = scmp.lt.s32.totalorder %s18, 2
      // Predicated region
      $region33: #{tpu_custom_call.1} parent=5 // pred_check
        %p258 = pneg %p257
      $region34: #{tpu_custom_call.1} parent=5 // pred_check_branch
        %260 = sbr.rel (%p258) target = $region36
      $region35: #{tpu_custom_call.1} parent=5 // pred_region
        // Predicated region
        $region37: #{tpu_custom_call.1} parent=35 // pred_check
          %p261 = pneg %p52
        $region38: #{tpu_custom_call.1} parent=35 // pred_check_branch
          %263 = sbr.rel (%p261) target = $region40
        $region39: #{tpu_custom_call.1} parent=35 // pred_region
          %s264 = smul.u32 2, %s25
          %p265 = scmp.lt.s32.totalorder %s264, 3
          %s266 = scalar_select %p265, %s264, 3
          %p267 = scmp.lt.s32.totalorder %s26, 0
          %s268 = scalar_select %p267, %s26, 0
          %s269 = sadd.s32 %s268, %s266
          %s270 = smul.addr %s269, 4
          %s271 = scalar_lea.vmem %s0, %s270
          %s272 = smul.u32 2, %s25
        $region40: #{tpu_custom_call.1} parent=35 // pred_fallthru
          _
      $region36: #{tpu_custom_call.1} parent=5 // pred_fallthru
        _
      %p273 = scmp.le.s32.totalorder 1, %s18
      %p274 = scmp.lt.s32.totalorder %s18, 3
      %p275 = pnand %p273, %p274
      %p276 = pneg %p275
      // Predicated region
      $region41: #{tpu_custom_call.1} parent=5 // pred_check
        _
      $region42: #{tpu_custom_call.1} parent=5 // pred_check_branch
        %278 = sbr.rel (%p275) target = $region44
      $region43: #{tpu_custom_call.1} parent=5 // pred_region
        %s279 = ssub.s32 %s18, 1
        // Predicated region
        $region45: #{tpu_custom_call.1} parent=43 // pred_check
          %p280 = pneg %p163
        $region46: #{tpu_custom_call.1} parent=43 // pred_check_branch
          %282 = sbr.rel (%p280) target = $region48
        $region47: #{tpu_custom_call.1} parent=43 // pred_region
          %283 = dma.done [#allocation3], 2048
        $region48: #{tpu_custom_call.1} parent=43 // pred_fallthru
          _
        %s284 = smul.u32 2, %s27
        %p285 = scmp.lt.s32.totalorder %s284, 3
        %s286 = scalar_select %p285, %s284, 3
        %p287 = scmp.lt.s32.totalorder %s28, 0
        %s288 = scalar_select %p287, %s28, 0
        %s289 = sadd.s32 %s288, %s286
        %s290 = smul.addr %s289, 4
        %s291 = scalar_lea.vmem %s0, %s290
        %p292 = pneg %p58
        %p293 = pneg %p55
        %p294 = pneg %p79
        %p295 = pneg %p76
        %p296 = pneg %p100
        %p297 = pneg %p97
        %p298 = pneg %p121
        %p299 = pneg %p118
        %p300 = pneg %p142
        %p301 = pneg %p139
        %p302 = pneg %p163
        %p303 = pneg %p160
        %p304 = pneg %p191
        %p305 = pneg %p188
        %s306 = sand.u32 %s178, 1
        %s307 = scalar_lea.sflag [#allocation4], %s306
        %s308 = sand.u32 %s178, 1
        %s309 = smul.addr %s308, 64
        %s310 = scalar_lea.vmem [#allocation5], %s309
        %p311 = pneg %p217
        %p312 = pneg %p214
        %s313 = smul.u32 2, %s27
        %p314 = scmp.lt.s32.totalorder %s313, 3
        %s315 = scalar_select %p314, %s313, 3
        %s316 = smul.addr %s315, 4
        %s317 = smul.addr %s316, 8
        %s318 = scalar_lea.vmem %s7, %s317
        %s319 = smul.u32 2, %s27
        %p320 = scmp.lt.s32.totalorder %s319, 3
        %s321 = scalar_select %p320, %s319, 3
        %p322 = scmp.lt.s32.totalorder %s28, 0
        %s323 = scalar_select %p322, %s28, 0
        %s324 = sadd.s32 %s323, %s321
        %s325 = smul.addr %s324, 4
        %s326 = scalar_lea.vmem %s0, %s325
        %s327 = smul.u32 2, %s27
        %s328 = smul.u32 2, %s27
        %s329 = smul.u32 2, %s27
        %p330 = scmp.lt.s32.totalorder %s329, 3
        %s331 = scalar_select %p330, %s329, 3
        %s332 = smul.addr %s331, 4
        %s333 = smul.addr %s332, 8
        %s334 = scalar_lea.vmem %s7, %s333
        %s335 = smul.u32 2, %s27
        %v336 = vld [vmem:[#allocation2] sm:$0xff]
        %v337 = vld [vmem:[#allocation2 + $0x8] sm:$0xff]
        %v338 = vld [vmem:[#allocation2 + $0x10] sm:$0xff]
        %v339 = vld [vmem:[#allocation2 + $0x18] sm:$0xff]
        %v340 = vld [vmem:[#allocation2 + $0x20] sm:$0xff]
        %v341 = vld [vmem:[#allocation2 + $0x28] sm:$0xff]
        %v342 = vld [vmem:[#allocation2 + $0x30] sm:$0xff]
        %v343 = vld [vmem:[#allocation2 + $0x38] sm:$0xff]
        %v344 = vld [vmem:[#allocation2 + $0x40] sm:$0xff]
        %v345 = vld [vmem:[#allocation2 + $0x48] sm:$0xff]
        %v346 = vld [vmem:[#allocation2 + $0x50] sm:$0xff]
        %v347 = vld [vmem:[#allocation2 + $0x58] sm:$0xff]
        %v348 = vld [vmem:[#allocation2 + $0x60] sm:$0xff]
        %v349 = vld [vmem:[#allocation2 + $0x68] sm:$0xff]
        %v350 = vld [vmem:[#allocation2 + $0x70] sm:$0xff]
        %v351 = vld [vmem:[#allocation2 + $0x78] sm:$0xff]
        %v352 = vld [vmem:[%s1] sm:$0xff]
        %v353 = vld [vmem:[%s1 + $0x8] sm:$0xff]
        %v354 = vld [vmem:[%s3] sm:$0xff]
        %v355 = vld [vmem:[%s3 + $0x8] sm:$0xff]
        %v356 = vld [vmem:[%s3 + $0x10] sm:$0xff]
        %v357 = vld [vmem:[%s3 + $0x18] sm:$0xff]
        %v358 = vld [vmem:[%s2] sm:$0xff]
        %v359 = vld [vmem:[%s2 + $0x8] sm:$0xff]
        %v360 = vld [vmem:[%s4] sm:$0xff]
        %v361 = vld [vmem:[%s4 + $0x8] sm:$0xff]
        %v362 = vld [vmem:[%s4 + $0x10] sm:$0xff]
        %v363 = vld [vmem:[%s4 + $0x18] sm:$0xff]
        %p364 = scmp.eq.s32.totalorder %s28, 0
        // Predicated region
        $region49: #{tpu_custom_call.1} parent=43 // pred_check
          %p365 = pneg %p364
        $region50: #{tpu_custom_call.1} parent=43 // pred_check_branch
          %367 = sbr.rel (%p365) target = $region52
        $region51: #{tpu_custom_call.1} parent=43 // pred_region
          %vm368 = vcmask 7168
          %369 = vst.msk [vmem:[%s334] sm:$0xff] %vm368, 0.0
          %370 = vst.msk [vmem:[%s334 + $0x8] sm:$0xff] %vm368, 0.0
          %371 = vst.msk [vmem:[%s334 + $0x10] sm:$0xff] %vm368, 0.0
          %372 = vst.msk [vmem:[%s334 + $0x18] sm:$0xff] %vm368, 0.0
          %373 = vst.msk [vmem:[%s334 + $0x20] sm:$0xff] %vm368, 0.0
          %374 = vst.msk [vmem:[%s334 + $0x28] sm:$0xff] %vm368, 0.0
          %375 = vst.msk [vmem:[%s334 + $0x30] sm:$0xff] %vm368, 0.0
          %376 = vst.msk [vmem:[%s334 + $0x38] sm:$0xff] %vm368, 0.0
        $region52: #{tpu_custom_call.1} parent=43 // pred_fallthru
          _
        %v377 = vld [vmem:[%s326] sm:$0xf]
        %378 = vmatprep.subr.mxu0 0.0
        %379 = vmatpush1.msra.mxu0 %v351
        %380 = vmatprep.subr.mxu0 0.0
        %381 = vmatpush1.msra.mxu0 %v350
        %382 = vmatprep.subr.mxu0 0.0
        %383 = vmatpush1.msra.mxu0 %v349
        %384 = vmatprep.subr.mxu0 0.0
        %385 = vmatpush1.msra.mxu0 %v348
        %386 = vmatprep.subr.mxu0 0.0
        %387 = vmatpush1.msra.mxu0 %v347
        %388 = vmatprep.subr.mxu0 0.0
        %389 = vmatpush1.msra.mxu0 %v346
        %390 = vmatprep.subr.mxu0 0.0
        %391 = vmatpush1.msra.mxu0 %v345
        %392 = vmatprep.subr.mxu0 0.0
        %393 = vmatpush1.msra.mxu0 %v344
        %394 = vmatprep.subr.mxu0 0.0
        %395 = vmatpush1.msra.mxu0 %v343
        %396 = vmatprep.subr.mxu0 0.0
        %397 = vmatpush1.msra.mxu0 %v342
        %398 = vmatprep.subr.mxu0 0.0
        %399 = vmatpush1.msra.mxu0 %v341
        %400 = vmatprep.subr.mxu0 0.0
        %401 = vmatpush1.msra.mxu0 %v340
        %402 = vmatprep.subr.mxu0 0.0
        %403 = vmatpush1.msra.mxu0 %v339
        %404 = vmatprep.subr.mxu0 0.0
        %405 = vmatpush1.msra.mxu0 %v338
        %406 = vmatprep.subr.mxu0 0.0
        %407 = vmatpush1.msra.mxu0 %v337
        %408 = vmatprep.subr.mxu0 0.0
        %409 = vmatpush1.msra.mxu0 %v336
        %410 = vmatprep.subr.mxu0 0.0
        %411 = vmatpush2.msra.mxu0 0.0
        %412 = vmatprep.subr.mxu0 0.0
        %413 = vmatpush2.msra.mxu0 0.0
        %414 = vmatprep.subr.mxu0 0.0
        %415 = vmatpush2.msra.mxu0 0.0
        %416 = vmatprep.subr.mxu0 0.0
        %417 = vmatpush2.msra.mxu0 0.0
        %418 = vmatprep.subr.mxu0 0.0
        %419 = vmatpush2.msra.mxu0 0.0
        %420 = vmatprep.subr.mxu0 0.0
        %421 = vmatpush2.msra.mxu0 0.0
        %422 = vmatprep.subr.mxu0 0.0
        %423 = vmatpush2.msra.mxu0 0.0
        %424 = vmatprep.subr.mxu0 0.0
        %425 = vmatpush2.msra.mxu0 0.0
        %426 = vmatprep.subr.mxu0 0.0
        %427 = vmatpush2.msra.mxu0 0.0
        %428 = vmatprep.subr.mxu0 0.0
        %429 = vmatpush2.msra.mxu0 0.0
        %430 = vmatprep.subr.mxu0 0.0
        %431 = vmatpush2.msra.mxu0 0.0
        %432 = vmatprep.subr.mxu0 0.0
        %433 = vmatpush2.msra.mxu0 0.0
        %434 = vmatprep.subr.mxu0 0.0
        %435 = vmatpush2.msra.mxu0 0.0
        %436 = vmatprep.subr.mxu0 0.0
        %437 = vmatpush2.msra.mxu0 0.0
        %438 = vmatprep.subr.mxu0 0.0
        %439 = vmatpush2.msra.mxu0 0.0
        %440 = vmatprep.subr.mxu0 0.0
        %441 = vmatpush2.msra.mxu0 0.0
        %442 = vmatprep.mubr.f32.mxu0 0.0
        %443 = vmatmul.mubr.f32.gmra.mxu0 %v377
        %v444 = vpop.f32.mrf.mxu0
        %v445 = vadd.f32 0.0, %v444
        %v446 = vpop.f32.mrf.mxu0
        %447 = vdwg.mxu0
        %449 = vset.pattern.permute.xlu0 0
        %450 = vperm.xlu0 %449, %v358
        %v451 = vpop.permute.xlu0 %450
        %454 = vset.pattern.permute.xlu0 0
        %455 = vperm.xlu0 %454, %v359
        %v456 = vpop.permute.xlu0 %455
        %vm458 = vcmask 31744
        %v460 = vsel %vm458, %v352, 0
        %v463 = vsel %vm458, %v353, 0
        %vm465 = vcmask 1043456
        %v467 = vsel %vm465, %v445, 0
        %469 = vmatprep.subr.mxu0 0.0
        %470 = vmatpush1.msra.mxu0 0.0
        %471 = vmatprep.subr.mxu0 0.0
        %472 = vmatpush1.msra.mxu0 0.0
        %473 = vmatprep.subr.mxu0 0.0
        %474 = vmatpush1.msra.mxu0 0.0
        %475 = vmatprep.subr.mxu0 0.0
        %476 = vmatpush1.msra.mxu0 0.0
        %477 = vmatprep.subr.mxu0 0.0
        %478 = vmatpush1.msra.mxu0 0.0
        %479 = vmatprep.subr.mxu0 0.0
        %480 = vmatpush1.msra.mxu0 0.0
        %481 = vmatprep.subr.mxu0 0.0
        %482 = vmatpush1.msra.mxu0 0.0
        %483 = vmatprep.subr.mxu0 0.0
        %484 = vmatpush1.msra.mxu0 0.0
        %485 = vmatprep.subr.mxu0 0.0
        %486 = vmatpush1.msra.mxu0 0.0
        %487 = vmatprep.subr.mxu0 0.0
        %488 = vmatpush1.msra.mxu0 0.0
        %489 = vmatprep.subr.mxu0 0.0
        %490 = vmatpush1.msra.mxu0 0.0
        %491 = vmatprep.subr.mxu0 0.0
        %492 = vmatpush1.msra.mxu0 0.0
        %493 = vmatprep.subr.mxu0 0.0
        %494 = vmatpush1.msra.mxu0 0.0
        %495 = vmatprep.subr.mxu0 0.0
        %496 = vmatpush1.msra.mxu0 0.0
        %497 = vmatprep.subr.mxu0 0.0
        %498 = vmatpush1.msra.mxu0 0.0
        %499 = vmatprep.subr.mxu0 0.0
        %500 = vmatpush1.msra.mxu0 %v467
        %501 = vmatprep.subr.mxu0 0.0
        %502 = vmatpush2.msra.mxu0 0.0
        %503 = vmatprep.subr.mxu0 0.0
        %504 = vmatpush2.msra.mxu0 0.0
        %505 = vmatprep.subr.mxu0 0.0
        %506 = vmatpush2.msra.mxu0 0.0
        %507 = vmatprep.subr.mxu0 0.0
        %508 = vmatpush2.msra.mxu0 0.0
        %509 = vmatprep.subr.mxu0 0.0
        %510 = vmatpush2.msra.mxu0 0.0
        %511 = vmatprep.subr.mxu0 0.0
        %512 = vmatpush2.msra.mxu0 0.0
        %513 = vmatprep.subr.mxu0 0.0
        %514 = vmatpush2.msra.mxu0 0.0
        %515 = vmatprep.subr.mxu0 0.0
        %516 = vmatpush2.msra.mxu0 0.0
        %517 = vmatprep.subr.mxu0 0.0
        %518 = vmatpush2.msra.mxu0 0.0
        %519 = vmatprep.subr.mxu0 0.0
        %520 = vmatpush2.msra.mxu0 0.0
        %521 = vmatprep.subr.mxu0 0.0
        %522 = vmatpush2.msra.mxu0 0.0
        %523 = vmatprep.subr.mxu0 0.0
        %524 = vmatpush2.msra.mxu0 0.0
        %525 = vmatprep.subr.mxu0 0.0
        %526 = vmatpush2.msra.mxu0 0.0
        %527 = vmatprep.subr.mxu0 0.0
        %528 = vmatpush2.msra.mxu0 0.0
        %529 = vmatprep.subr.mxu0 0.0
        %530 = vmatpush2.msra.mxu0 0.0
        %531 = vmatprep.subr.mxu0 0.0
        %532 = vmatpush2.msra.mxu0 0.0
        %533 = vmatprep.mubr.f32.mxu0 0.0
        %534 = vmatmul.mubr.f32.gmra.mxu0 %v460
        %v535 = vpop.f32.mrf.mxu0
        %v536 = vadd.f32 %v451, %v535
        %v537 = vpop.f32.mrf.mxu0
        %538 = vmatprep.mubr.f32.mxu0 0.0
        %539 = vmatmul.mubr.f32.gmra.mxu0 %v463
        %v540 = vpop.f32.mrf.mxu0
        %v541 = vadd.f32 %v456, %v540
        %v542 = vpop.f32.mrf.mxu0
        %543 = vdwg.mxu0
        %v544 = vmax.f32 %v536, 0.0
        %v545 = vmax.f32 %v541, 0.0
        %546 = vmatprep.subr.mxu0 0.0
        %547 = vmatpush1.msra.mxu0 %v351
        %548 = vmatprep.subr.mxu0 0.0
        %549 = vmatpush1.msra.mxu0 %v350
        %550 = vmatprep.subr.mxu0 0.0
        %551 = vmatpush1.msra.mxu0 %v349
        %552 = vmatprep.subr.mxu0 0.0
        %553 = vmatpush1.msra.mxu0 %v348
        %554 = vmatprep.subr.mxu0 0.0
        %555 = vmatpush1.msra.mxu0 %v347
        %556 = vmatprep.subr.mxu0 0.0
        %557 = vmatpush1.msra.mxu0 %v346
        %558 = vmatprep.subr.mxu0 0.0
        %559 = vmatpush1.msra.mxu0 %v345
        %560 = vmatprep.subr.mxu0 0.0
        %561 = vmatpush1.msra.mxu0 %v344
        %562 = vmatprep.subr.mxu0 0.0
        %563 = vmatpush1.msra.mxu0 %v343
        %564 = vmatprep.subr.mxu0 0.0
        %565 = vmatpush1.msra.mxu0 %v342
        %566 = vmatprep.subr.mxu0 0.0
        %567 = vmatpush1.msra.mxu0 %v341
        %568 = vmatprep.subr.mxu0 0.0
        %569 = vmatpush1.msra.mxu0 %v340
        %570 = vmatprep.subr.mxu0 0.0
        %571 = vmatpush1.msra.mxu0 %v339
        %572 = vmatprep.subr.mxu0 0.0
        %573 = vmatpush1.msra.mxu0 %v338
        %574 = vmatprep.subr.mxu0 0.0
        %575 = vmatpush1.msra.mxu0 %v337
        %576 = vmatprep.subr.mxu0 0.0
        %577 = vmatpush1.msra.mxu0 %v336
        %578 = vmatprep.subr.mxu0 0.0
        %579 = vmatpush2.msra.mxu0 0.0
        %580 = vmatprep.subr.mxu0 0.0
        %581 = vmatpush2.msra.mxu0 0.0
        %582 = vmatprep.subr.mxu0 0.0
        %583 = vmatpush2.msra.mxu0 0.0
        %584 = vmatprep.subr.mxu0 0.0
        %585 = vmatpush2.msra.mxu0 0.0
        %586 = vmatprep.subr.mxu0 0.0
        %587 = vmatpush2.msra.mxu0 0.0
        %588 = vmatprep.subr.mxu0 0.0
        %589 = vmatpush2.msra.mxu0 0.0
        %590 = vmatprep.subr.mxu0 0.0
        %591 = vmatpush2.msra.mxu0 0.0
        %592 = vmatprep.subr.mxu0 0.0
        %593 = vmatpush2.msra.mxu0 0.0
        %594 = vmatprep.subr.mxu0 0.0
        %595 = vmatpush2.msra.mxu0 0.0
        %596 = vmatprep.subr.mxu0 0.0
        %597 = vmatpush2.msra.mxu0 0.0
        %598 = vmatprep.subr.mxu0 0.0
        %599 = vmatpush2.msra.mxu0 0.0
        %600 = vmatprep.subr.mxu0 0.0
        %601 = vmatpush2.msra.mxu0 0.0
        %602 = vmatprep.subr.mxu0 0.0
        %603 = vmatpush2.msra.mxu0 0.0
        %604 = vmatprep.subr.mxu0 0.0
        %605 = vmatpush2.msra.mxu0 0.0
        %606 = vmatprep.subr.mxu0 0.0
        %607 = vmatpush2.msra.mxu0 0.0
        %608 = vmatprep.subr.mxu0 0.0
        %609 = vmatpush2.msra.mxu0 0.0
        %610 = vmatprep.mubr.f32.mxu0 0.0
        %611 = vmatmul.mubr.f32.gmra.mxu0 %v544
        %v612 = vpop.f32.mrf.mxu0
        %v613 = vadd.f32 0.0, %v612
        %v614 = vpop.f32.mrf.mxu0
        %615 = vmatprep.mubr.f32.mxu0 0.0
        %616 = vmatmul.mubr.f32.gmra.mxu0 %v545
        %v617 = vpop.f32.mrf.mxu0
        %v618 = vadd.f32 0.0, %v617
        %v619 = vpop.f32.mrf.mxu0
        %620 = vdwg.mxu0
        %622 = vset.pattern.permute.xlu0 0
        %623 = vperm.xlu0 %622, %v360
        %v624 = vpop.permute.xlu0 %623
        %627 = vset.pattern.permute.xlu0 0
        %628 = vperm.xlu0 %627, %v361
        %v629 = vpop.permute.xlu0 %628
        %632 = vset.pattern.permute.xlu0 0
        %633 = vperm.xlu0 %632, %v362
        %v634 = vpop.permute.xlu0 %633
        %637 = vset.pattern.permute.xlu0 0
        %638 = vperm.xlu0 %637, %v363
        %v639 = vpop.permute.xlu0 %638
        %vm641 = vcmask 130048
        %v643 = vsel %vm641, %v354, 0
        %v646 = vsel %vm641, %v355, 0
        %v649 = vsel %vm641, %v356, 0
        %v652 = vsel %vm641, %v357, 0
        %654 = vmatprep.subr.mxu0 0.0
        %655 = vmatpush1.msra.mxu0 0.0
        %656 = vmatprep.subr.mxu0 0.0
        %657 = vmatpush1.msra.mxu0 0.0
        %658 = vmatprep.subr.mxu0 0.0
        %659 = vmatpush1.msra.mxu0 0.0
        %660 = vmatprep.subr.mxu0 0.0
        %661 = vmatpush1.msra.mxu0 0.0
        %662 = vmatprep.subr.mxu0 0.0
        %663 = vmatpush1.msra.mxu0 0.0
        %664 = vmatprep.subr.mxu0 0.0
        %665 = vmatpush1.msra.mxu0 0.0
        %666 = vmatprep.subr.mxu0 0.0
        %667 = vmatpush1.msra.mxu0 0.0
        %668 = vmatprep.subr.mxu0 0.0
        %669 = vmatpush1.msra.mxu0 0.0
        %670 = vmatprep.subr.mxu0 0.0
        %671 = vmatpush1.msra.mxu0 0.0
        %672 = vmatprep.subr.mxu0 0.0
        %673 = vmatpush1.msra.mxu0 0.0
        %674 = vmatprep.subr.mxu0 0.0
        %675 = vmatpush1.msra.mxu0 0.0
        %676 = vmatprep.subr.mxu0 0.0
        %677 = vmatpush1.msra.mxu0 0.0
        %678 = vmatprep.subr.mxu0 0.0
        %679 = vmatpush1.msra.mxu0 0.0
        %680 = vmatprep.subr.mxu0 0.0
        %681 = vmatpush1.msra.mxu0 0.0
        %682 = vmatprep.subr.mxu0 0.0
        %683 = vmatpush1.msra.mxu0 %v618
        %684 = vmatprep.subr.mxu0 0.0
        %685 = vmatpush1.msra.mxu0 %v613
        %686 = vmatprep.subr.mxu0 0.0
        %687 = vmatpush2.msra.mxu0 0.0
        %688 = vmatprep.subr.mxu0 0.0
        %689 = vmatpush2.msra.mxu0 0.0
        %690 = vmatprep.subr.mxu0 0.0
        %691 = vmatpush2.msra.mxu0 0.0
        %692 = vmatprep.subr.mxu0 0.0
        %693 = vmatpush2.msra.mxu0 0.0
        %694 = vmatprep.subr.mxu0 0.0
        %695 = vmatpush2.msra.mxu0 0.0
        %696 = vmatprep.subr.mxu0 0.0
        %697 = vmatpush2.msra.mxu0 0.0
        %698 = vmatprep.subr.mxu0 0.0
        %699 = vmatpush2.msra.mxu0 0.0
        %700 = vmatprep.subr.mxu0 0.0
        %701 = vmatpush2.msra.mxu0 0.0
        %702 = vmatprep.subr.mxu0 0.0
        %703 = vmatpush2.msra.mxu0 0.0
        %704 = vmatprep.subr.mxu0 0.0
        %705 = vmatpush2.msra.mxu0 0.0
        %706 = vmatprep.subr.mxu0 0.0
        %707 = vmatpush2.msra.mxu0 0.0
        %708 = vmatprep.subr.mxu0 0.0
        %709 = vmatpush2.msra.mxu0 0.0
        %710 = vmatprep.subr.mxu0 0.0
        %711 = vmatpush2.msra.mxu0 0.0
        %712 = vmatprep.subr.mxu0 0.0
        %713 = vmatpush2.msra.mxu0 0.0
        %714 = vmatprep.subr.mxu0 0.0
        %715 = vmatpush2.msra.mxu0 0.0
        %716 = vmatprep.subr.mxu0 0.0
        %717 = vmatpush2.msra.mxu0 0.0
        %718 = vmatprep.mubr.f32.mxu0 0.0
        %719 = vmatmul.mubr.f32.gmra.mxu0 %v643
        %v720 = vpop.f32.mrf.mxu0
        %v721 = vadd.f32 %v624, %v720
        %v722 = vpop.f32.mrf.mxu0
        %723 = vmatprep.mubr.f32.mxu0 0.0
        %724 = vmatmul.mubr.f32.gmra.mxu0 %v646
        %v725 = vpop.f32.mrf.mxu0
        %v726 = vadd.f32 %v629, %v725
        %v727 = vpop.f32.mrf.mxu0
        %728 = vmatprep.mubr.f32.mxu0 0.0
        %729 = vmatmul.mubr.f32.gmra.mxu0 %v649
        %v730 = vpop.f32.mrf.mxu0
        %v731 = vadd.f32 %v634, %v730
        %v732 = vpop.f32.mrf.mxu0
        %733 = vmatprep.mubr.f32.mxu0 0.0
        %734 = vmatmul.mubr.f32.gmra.mxu0 %v652
        %v735 = vpop.f32.mrf.mxu0
        %v736 = vadd.f32 %v639, %v735
        %v737 = vpop.f32.mrf.mxu0
        %738 = vdwg.mxu0
        %v739 = vmax.f32 %v721, 0.0
        %v740 = vmax.f32 %v726, 0.0
        %v741 = vmax.f32 %v731, 0.0
        %v742 = vmax.f32 %v736, 0.0
        %743 = vst [vmem:[%s310] sm:$0xff] %v739
        %744 = vst [vmem:[%s310 + $0x8] sm:$0xff] %v740
        %745 = vst [vmem:[%s310 + $0x10] sm:$0xff] %v741
        %746 = vst [vmem:[%s310 + $0x18] sm:$0xff] %v742
        %v747 = vld [vmem:[%s334] sm:$0xff]
        %v748 = vld [vmem:[%s334 + $0x8] sm:$0xff]
        %v749 = vld [vmem:[%s334 + $0x10] sm:$0xff]
        %v750 = vld [vmem:[%s334 + $0x18] sm:$0xff]
        %751 = vadd.xlane.f32.xlu0 %v739
        %v752 = vpop.xlane.xlu0 %751
        %753 = vadd.xlane.f32.xlu0 %v740
        %v754 = vpop.xlane.xlu0 %753
        %755 = vadd.xlane.f32.xlu0 %v741
        %v756 = vpop.xlane.xlu0 %755
        %757 = vadd.xlane.f32.xlu0 %v742
        %v758 = vpop.xlane.xlu0 %757
        %v759 = vadd.f32 %v747, %v752
        %v760 = vadd.f32 %v748, %v754
        %v761 = vadd.f32 %v749, %v756
        %v762 = vadd.f32 %v750, %v758
        %vm763 = vcmask 7168
        %764 = vst.msk [vmem:[%s334] sm:$0xff] %vm763, %v759
        %765 = vst.msk [vmem:[%s334 + $0x8] sm:$0xff] %vm763, %v760
        %766 = vst.msk [vmem:[%s334 + $0x10] sm:$0xff] %vm763, %v761
        %767 = vst.msk [vmem:[%s334 + $0x18] sm:$0xff] %vm763, %v762
        %s768 = scalar_lea.vmem %s326, 4
        %v769 = vld [vmem:[%s768] sm:$0xf]
        %770 = vmatprep.subr.mxu0 0.0
        %771 = vmatpush1.msra.mxu0 %v351
        %772 = vmatprep.subr.mxu0 0.0
        %773 = vmatpush1.msra.mxu0 %v350
        %774 = vmatprep.subr.mxu0 0.0
        %775 = vmatpush1.msra.mxu0 %v349
        %776 = vmatprep.subr.mxu0 0.0
        %777 = vmatpush1.msra.mxu0 %v348
        %778 = vmatprep.subr.mxu0 0.0
        %779 = vmatpush1.msra.mxu0 %v347
        %780 = vmatprep.subr.mxu0 0.0
        %781 = vmatpush1.msra.mxu0 %v346
        %782 = vmatprep.subr.mxu0 0.0
        %783 = vmatpush1.msra.mxu0 %v345
        %784 = vmatprep.subr.mxu0 0.0
        %785 = vmatpush1.msra.mxu0 %v344
        %786 = vmatprep.subr.mxu0 0.0
        %787 = vmatpush1.msra.mxu0 %v343
        %788 = vmatprep.subr.mxu0 0.0
        %789 = vmatpush1.msra.mxu0 %v342
        %790 = vmatprep.subr.mxu0 0.0
        %791 = vmatpush1.msra.mxu0 %v341
        %792 = vmatprep.subr.mxu0 0.0
        %793 = vmatpush1.msra.mxu0 %v340
        %794 = vmatprep.subr.mxu0 0.0
        %795 = vmatpush1.msra.mxu0 %v339
        %796 = vmatprep.subr.mxu0 0.0
        %797 = vmatpush1.msra.mxu0 %v338
        %798 = vmatprep.subr.mxu0 0.0
        %799 = vmatpush1.msra.mxu0 %v337
        %800 = vmatprep.subr.mxu0 0.0
        %801 = vmatpush1.msra.mxu0 %v336
        %802 = vmatprep.subr.mxu0 0.0
        %803 = vmatpush2.msra.mxu0 0.0
        %804 = vmatprep.subr.mxu0 0.0
        %805 = vmatpush2.msra.mxu0 0.0
        %806 = vmatprep.subr.mxu0 0.0
        %807 = vmatpush2.msra.mxu0 0.0
        %808 = vmatprep.subr.mxu0 0.0
        %809 = vmatpush2.msra.mxu0 0.0
        %810 = vmatprep.subr.mxu0 0.0
        %811 = vmatpush2.msra.mxu0 0.0
        %812 = vmatprep.subr.mxu0 0.0
        %813 = vmatpush2.msra.mxu0 0.0
        %814 = vmatprep.subr.mxu0 0.0
        %815 = vmatpush2.msra.mxu0 0.0
        %816 = vmatprep.subr.mxu0 0.0
        %817 = vmatpush2.msra.mxu0 0.0
        %818 = vmatprep.subr.mxu0 0.0
        %819 = vmatpush2.msra.mxu0 0.0
        %820 = vmatprep.subr.mxu0 0.0
        %821 = vmatpush2.msra.mxu0 0.0
        %822 = vmatprep.subr.mxu0 0.0
        %823 = vmatpush2.msra.mxu0 0.0
        %824 = vmatprep.subr.mxu0 0.0
        %825 = vmatpush2.msra.mxu0 0.0
        %826 = vmatprep.subr.mxu0 0.0
        %827 = vmatpush2.msra.mxu0 0.0
        %828 = vmatprep.subr.mxu0 0.0
        %829 = vmatpush2.msra.mxu0 0.0
        %830 = vmatprep.subr.mxu0 0.0
        %831 = vmatpush2.msra.mxu0 0.0
        %832 = vmatprep.subr.mxu0 0.0
        %833 = vmatpush2.msra.mxu0 0.0
        %834 = vmatprep.mubr.f32.mxu0 0.0
        %835 = vmatmul.mubr.f32.gmra.mxu0 %v769
        %v836 = vpop.f32.mrf.mxu0
        %v837 = vadd.f32 0.0, %v836
        %v838 = vpop.f32.mrf.mxu0
        %839 = vdwg.mxu0
        %v841 = vsel %vm465, %v837, 0
        %843 = vmatprep.subr.mxu0 0.0
        %844 = vmatpush1.msra.mxu0 0.0
        %845 = vmatprep.subr.mxu0 0.0
        %846 = vmatpush1.msra.mxu0 0.0
        %847 = vmatprep.subr.mxu0 0.0
        %848 = vmatpush1.msra.mxu0 0.0
        %849 = vmatprep.subr.mxu0 0.0
        %850 = vmatpush1.msra.mxu0 0.0
        %851 = vmatprep.subr.mxu0 0.0
        %852 = vmatpush1.msra.mxu0 0.0
        %853 = vmatprep.subr.mxu0 0.0
        %854 = vmatpush1.msra.mxu0 0.0
        %855 = vmatprep.subr.mxu0 0.0
        %856 = vmatpush1.msra.mxu0 0.0
        %857 = vmatprep.subr.mxu0 0.0
        %858 = vmatpush1.msra.mxu0 0.0
        %859 = vmatprep.subr.mxu0 0.0
        %860 = vmatpush1.msra.mxu0 0.0
        %861 = vmatprep.subr.mxu0 0.0
        %862 = vmatpush1.msra.mxu0 0.0
        %863 = vmatprep.subr.mxu0 0.0
        %864 = vmatpush1.msra.mxu0 0.0
        %865 = vmatprep.subr.mxu0 0.0
        %866 = vmatpush1.msra.mxu0 0.0
        %867 = vmatprep.subr.mxu0 0.0
        %868 = vmatpush1.msra.mxu0 0.0
        %869 = vmatprep.subr.mxu0 0.0
        %870 = vmatpush1.msra.mxu0 0.0
        %871 = vmatprep.subr.mxu0 0.0
        %872 = vmatpush1.msra.mxu0 0.0
        %873 = vmatprep.subr.mxu0 0.0
        %874 = vmatpush1.msra.mxu0 %v841
        %875 = vmatprep.subr.mxu0 0.0
        %876 = vmatpush2.msra.mxu0 0.0
        %877 = vmatprep.subr.mxu0 0.0
        %878 = vmatpush2.msra.mxu0 0.0
        %879 = vmatprep.subr.mxu0 0.0
        %880 = vmatpush2.msra.mxu0 0.0
        %881 = vmatprep.subr.mxu0 0.0
        %882 = vmatpush2.msra.mxu0 0.0
        %883 = vmatprep.subr.mxu0 0.0
        %884 = vmatpush2.msra.mxu0 0.0
        %885 = vmatprep.subr.mxu0 0.0
        %886 = vmatpush2.msra.mxu0 0.0
        %887 = vmatprep.subr.mxu0 0.0
        %888 = vmatpush2.msra.mxu0 0.0
        %889 = vmatprep.subr.mxu0 0.0
        %890 = vmatpush2.msra.mxu0 0.0
        %891 = vmatprep.subr.mxu0 0.0
        %892 = vmatpush2.msra.mxu0 0.0
        %893 = vmatprep.subr.mxu0 0.0
        %894 = vmatpush2.msra.mxu0 0.0
        %895 = vmatprep.subr.mxu0 0.0
        %896 = vmatpush2.msra.mxu0 0.0
        %897 = vmatprep.subr.mxu0 0.0
        %898 = vmatpush2.msra.mxu0 0.0
        %899 = vmatprep.subr.mxu0 0.0
        %900 = vmatpush2.msra.mxu0 0.0
        %901 = vmatprep.subr.mxu0 0.0
        %902 = vmatpush2.msra.mxu0 0.0
        %903 = vmatprep.subr.mxu0 0.0
        %904 = vmatpush2.msra.mxu0 0.0
        %905 = vmatprep.subr.mxu0 0.0
        %906 = vmatpush2.msra.mxu0 0.0
        %907 = vmatprep.mubr.f32.mxu0 0.0
        %908 = vmatmul.mubr.f32.gmra.mxu0 %v460
        %v909 = vpop.f32.mrf.mxu0
        %v910 = vadd.f32 %v451, %v909
        %v911 = vpop.f32.mrf.mxu0
        %912 = vmatprep.mubr.f32.mxu0 0.0
        %913 = vmatmul.mubr.f32.gmra.mxu0 %v463
        %v914 = vpop.f32.mrf.mxu0
        %v915 = vadd.f32 %v456, %v914
        %v916 = vpop.f32.mrf.mxu0
        %917 = vdwg.mxu0
        %v918 = vmax.f32 %v910, 0.0
        %v919 = vmax.f32 %v915, 0.0
        %920 = vmatprep.subr.mxu0 0.0
        %921 = vmatpush1.msra.mxu0 %v351
        %922 = vmatprep.subr.mxu0 0.0
        %923 = vmatpush1.msra.mxu0 %v350
        %924 = vmatprep.subr.mxu0 0.0
        %925 = vmatpush1.msra.mxu0 %v349
        %926 = vmatprep.subr.mxu0 0.0
        %927 = vmatpush1.msra.mxu0 %v348
        %928 = vmatprep.subr.mxu0 0.0
        %929 = vmatpush1.msra.mxu0 %v347
        %930 = vmatprep.subr.mxu0 0.0
        %931 = vmatpush1.msra.mxu0 %v346
        %932 = vmatprep.subr.mxu0 0.0
        %933 = vmatpush1.msra.mxu0 %v345
        %934 = vmatprep.subr.mxu0 0.0
        %935 = vmatpush1.msra.mxu0 %v344
        %936 = vmatprep.subr.mxu0 0.0
        %937 = vmatpush1.msra.mxu0 %v343
        %938 = vmatprep.subr.mxu0 0.0
        %939 = vmatpush1.msra.mxu0 %v342
        %940 = vmatprep.subr.mxu0 0.0
        %941 = vmatpush1.msra.mxu0 %v341
        %942 = vmatprep.subr.mxu0 0.0
        %943 = vmatpush1.msra.mxu0 %v340
        %944 = vmatprep.subr.mxu0 0.0
        %945 = vmatpush1.msra.mxu0 %v339
        %946 = vmatprep.subr.mxu0 0.0
        %947 = vmatpush1.msra.mxu0 %v338
        %948 = vmatprep.subr.mxu0 0.0
        %949 = vmatpush1.msra.mxu0 %v337
        %950 = vmatprep.subr.mxu0 0.0
        %951 = vmatpush1.msra.mxu0 %v336
        %952 = vmatprep.subr.mxu0 0.0
        %953 = vmatpush2.msra.mxu0 0.0
        %954 = vmatprep.subr.mxu0 0.0
        %955 = vmatpush2.msra.mxu0 0.0
        %956 = vmatprep.subr.mxu0 0.0
        %957 = vmatpush2.msra.mxu0 0.0
        %958 = vmatprep.subr.mxu0 0.0
        %959 = vmatpush2.msra.mxu0 0.0
        %960 = vmatprep.subr.mxu0 0.0
        %961 = vmatpush2.msra.mxu0 0.0
        %962 = vmatprep.subr.mxu0 0.0
        %963 = vmatpush2.msra.mxu0 0.0
        %964 = vmatprep.subr.mxu0 0.0
        %965 = vmatpush2.msra.mxu0 0.0
        %966 = vmatprep.subr.mxu0 0.0
        %967 = vmatpush2.msra.mxu0 0.0
        %968 = vmatprep.subr.mxu0 0.0
        %969 = vmatpush2.msra.mxu0 0.0
        %970 = vmatprep.subr.mxu0 0.0
        %971 = vmatpush2.msra.mxu0 0.0
        %972 = vmatprep.subr.mxu0 0.0
        %973 = vmatpush2.msra.mxu0 0.0
        %974 = vmatprep.subr.mxu0 0.0
        %975 = vmatpush2.msra.mxu0 0.0
        %976 = vmatprep.subr.mxu0 0.0
        %977 = vmatpush2.msra.mxu0 0.0
        %978 = vmatprep.subr.mxu0 0.0
        %979 = vmatpush2.msra.mxu0 0.0
        %980 = vmatprep.subr.mxu0 0.0
        %981 = vmatpush2.msra.mxu0 0.0
        %982 = vmatprep.subr.mxu0 0.0
        %983 = vmatpush2.msra.mxu0 0.0
        %984 = vmatprep.mubr.f32.mxu0 0.0
        %985 = vmatmul.mubr.f32.gmra.mxu0 %v918
        %v986 = vpop.f32.mrf.mxu0
        %v987 = vadd.f32 0.0, %v986
        %v988 = vpop.f32.mrf.mxu0
        %989 = vmatprep.mubr.f32.mxu0 0.0
        %990 = vmatmul.mubr.f32.gmra.mxu0 %v919
        %v991 = vpop.f32.mrf.mxu0
        %v992 = vadd.f32 0.0, %v991
        %v993 = vpop.f32.mrf.mxu0
        %994 = vdwg.mxu0
        %995 = vmatprep.subr.mxu0 0.0
        %996 = vmatpush1.msra.mxu0 0.0
        %997 = vmatprep.subr.mxu0 0.0
        %998 = vmatpush1.msra.mxu0 0.0
        %999 = vmatprep.subr.mxu0 0.0
        %1000 = vmatpush1.msra.mxu0 0.0
        %1001 = vmatprep.subr.mxu0 0.0
        %1002 = vmatpush1.msra.mxu0 0.0
        %1003 = vmatprep.subr.mxu0 0.0
        %1004 = vmatpush1.msra.mxu0 0.0
        %1005 = vmatprep.subr.mxu0 0.0
        %1006 = vmatpush1.msra.mxu0 0.0
        %1007 = vmatprep.subr.mxu0 0.0
        %1008 = vmatpush1.msra.mxu0 0.0
        %1009 = vmatprep.subr.mxu0 0.0
        %1010 = vmatpush1.msra.mxu0 0.0
        %1011 = vmatprep.subr.mxu0 0.0
        %1012 = vmatpush1.msra.mxu0 0.0
        %1013 = vmatprep.subr.mxu0 0.0
        %1014 = vmatpush1.msra.mxu0 0.0
        %1015 = vmatprep.subr.mxu0 0.0
        %1016 = vmatpush1.msra.mxu0 0.0
        %1017 = vmatprep.subr.mxu0 0.0
        %1018 = vmatpush1.msra.mxu0 0.0
        %1019 = vmatprep.subr.mxu0 0.0
        %1020 = vmatpush1.msra.mxu0 0.0
        %1021 = vmatprep.subr.mxu0 0.0
        %1022 = vmatpush1.msra.mxu0 0.0
        %1023 = vmatprep.subr.mxu0 0.0
        %1024 = vmatpush1.msra.mxu0 %v992
        %1025 = vmatprep.subr.mxu0 0.0
        %1026 = vmatpush1.msra.mxu0 %v987
        %1027 = vmatprep.subr.mxu0 0.0
        %1028 = vmatpush2.msra.mxu0 0.0
        %1029 = vmatprep.subr.mxu0 0.0
        %1030 = vmatpush2.msra.mxu0 0.0
        %1031 = vmatprep.subr.mxu0 0.0
        %1032 = vmatpush2.msra.mxu0 0.0
        %1033 = vmatprep.subr.mxu0 0.0
        %1034 = vmatpush2.msra.mxu0 0.0
        %1035 = vmatprep.subr.mxu0 0.0
        %1036 = vmatpush2.msra.mxu0 0.0
        %1037 = vmatprep.subr.mxu0 0.0
        %1038 = vmatpush2.msra.mxu0 0.0
        %1039 = vmatprep.subr.mxu0 0.0
        %1040 = vmatpush2.msra.mxu0 0.0
        %1041 = vmatprep.subr.mxu0 0.0
        %1042 = vmatpush2.msra.mxu0 0.0
        %1043 = vmatprep.subr.mxu0 0.0
        %1044 = vmatpush2.msra.mxu0 0.0
        %1045 = vmatprep.subr.mxu0 0.0
        %1046 = vmatpush2.msra.mxu0 0.0
        %1047 = vmatprep.subr.mxu0 0.0
        %1048 = vmatpush2.msra.mxu0 0.0
        %1049 = vmatprep.subr.mxu0 0.0
        %1050 = vmatpush2.msra.mxu0 0.0
        %1051 = vmatprep.subr.mxu0 0.0
        %1052 = vmatpush2.msra.mxu0 0.0
        %1053 = vmatprep.subr.mxu0 0.0
        %1054 = vmatpush2.msra.mxu0 0.0
        %1055 = vmatprep.subr.mxu0 0.0
        %1056 = vmatpush2.msra.mxu0 0.0
        %1057 = vmatprep.subr.mxu0 0.0
        %1058 = vmatpush2.msra.mxu0 0.0
        %1059 = vmatprep.mubr.f32.mxu0 0.0
        %1060 = vmatmul.mubr.f32.gmra.mxu0 %v643
        %v1061 = vpop.f32.mrf.mxu0
        %v1062 = vadd.f32 %v624, %v1061
        %v1063 = vpop.f32.mrf.mxu0
        %1064 = vmatprep.mubr.f32.mxu0 0.0
        %1065 = vmatmul.mubr.f32.gmra.mxu0 %v646
        %v1066 = vpop.f32.mrf.mxu0
        %v1067 = vadd.f32 %v629, %v1066
        %v1068 = vpop.f32.mrf.mxu0
        %1069 = vmatprep.mubr.f32.mxu0 0.0
        %1070 = vmatmul.mubr.f32.gmra.mxu0 %v649
        %v1071 = vpop.f32.mrf.mxu0
        %v1072 = vadd.f32 %v634, %v1071
        %v1073 = vpop.f32.mrf.mxu0
        %1074 = vmatprep.mubr.f32.mxu0 0.0
        %1075 = vmatmul.mubr.f32.gmra.mxu0 %v652
        %v1076 = vpop.f32.mrf.mxu0
        %v1077 = vadd.f32 %v639, %v1076
        %v1078 = vpop.f32.mrf.mxu0
        %1079 = vdwg.mxu0
        %v1080 = vmax.f32 %v1062, 0.0
        %v1081 = vmax.f32 %v1067, 0.0
        %v1082 = vmax.f32 %v1072, 0.0
        %v1083 = vmax.f32 %v1077, 0.0
        %s1084 = scalar_lea.vmem %s310, 32 [#allocation5]
        %1085 = vst [vmem:[%s1084] sm:$0xff] %v1080
        %1086 = vst [vmem:[%s1084 + $0x8] sm:$0xff] %v1081
        %1087 = vst [vmem:[%s1084 + $0x10] sm:$0xff] %v1082
        %1088 = vst [vmem:[%s1084 + $0x18] sm:$0xff] %v1083
        %s1089 = scalar_lea.vmem %s334, 32
        %v1090 = vld [vmem:[%s1089] sm:$0xff]
        %v1091 = vld [vmem:[%s1089 + $0x8] sm:$0xff]
        %v1092 = vld [vmem:[%s1089 + $0x10] sm:$0xff]
        %v1093 = vld [vmem:[%s1089 + $0x18] sm:$0xff]
        %1094 = vadd.xlane.f32.xlu0 %v1080
        %v1095 = vpop.xlane.xlu0 %1094
        %1096 = vadd.xlane.f32.xlu0 %v1081
        %v1097 = vpop.xlane.xlu0 %1096
        %1098 = vadd.xlane.f32.xlu0 %v1082
        %v1099 = vpop.xlane.xlu0 %1098
        %1100 = vadd.xlane.f32.xlu0 %v1083
        %v1101 = vpop.xlane.xlu0 %1100
        %v1102 = vadd.f32 %v1090, %v1095
        %v1103 = vadd.f32 %v1091, %v1097
        %v1104 = vadd.f32 %v1092, %v1099
        %v1105 = vadd.f32 %v1093, %v1101
        %1106 = vst.msk [vmem:[%s1089] sm:$0xff] %vm763, %v1102
        %1107 = vst.msk [vmem:[%s1089 + $0x8] sm:$0xff] %vm763, %v1103
        %1108 = vst.msk [vmem:[%s1089 + $0x10] sm:$0xff] %vm763, %v1104
        %1109 = vst.msk [vmem:[%s1089 + $0x18] sm:$0xff] %vm763, %v1105
        %s1110 = sand.u32 %s178, 1
        %s1111 = scalar_lea.sflag [#allocation4], %s1110
        %s1112 = sand.u32 %s178, 1
        %s1113 = smul.addr %s1112, 64
        %s1114 = scalar_lea.vmem [#allocation5], %s1113
        %s1115 = smul.u32 2, %s27
        %p1116 = scmp.lt.s32.totalorder %s1115, 3
        %s1117 = scalar_select %p1116, %s1115, 3
        %s1118 = smul.addr %s1117, 4
        %s1119 = smul.addr %s1118, 8
        %s1120 = scalar_lea.vmem %s7, %s1119
        // Predicated region
        $region53: #{tpu_custom_call.1} parent=43 // pred_check
          %p1121 = pneg %p188
        $region54: #{tpu_custom_call.1} parent=43 // pred_check_branch
          %1123 = sbr.rel (%p1121) target = $region56
        $region55: #{tpu_custom_call.1} parent=43 // pred_region
          %s1124 = smul.u32 2, %s27
          %s1126 = ssub.s32 1024, 1024
          %1127 = vsyncadd %s1111, %s1126
          %s1128 = smul.addr %s1124, 4
          %s1129 = sadd.s32 %s28, %s1128
          %s1130 = smul.addr %s1129, 128
          %s1131 = scalar_lea.hbm %s6, %s1130
          %s1132 = sshll.u32 %s1114, 4
          %s1133 = int_to_ptr.vmem [resolvable:$true] %s1132
          %1138 = dma.vmem_to_hbm [thread:$0]  %s1133, 1024, %s1131, %s1111, 128, 128, 8
        $region56: #{tpu_custom_call.1} parent=43 // pred_fallthru
          _
        // Predicated region
        $region57: #{tpu_custom_call.1} parent=43 // pred_check
          %p1139 = pneg %p214
        $region58: #{tpu_custom_call.1} parent=43 // pred_check_branch
          %1141 = sbr.rel (%p1139) target = $region60
        $region59: #{tpu_custom_call.1} parent=43 // pred_region
          %s1142 = smul.u32 2, %s27
        $region60: #{tpu_custom_call.1} parent=43 // pred_fallthru
          _
      $region44: #{tpu_custom_call.1} parent=5 // pred_fallthru
        _
      %p1143 = scmp.le.s32.totalorder 2, %s18
      // Predicated region
      $region61: #{tpu_custom_call.1} parent=5 // pred_check
        %p1144 = pneg %p1143
      $region62: #{tpu_custom_call.1} parent=5 // pred_check_branch
        %1146 = sbr.rel (%p1144) target = $region64
      $region63: #{tpu_custom_call.1} parent=5 // pred_region
        %s1147 = ssub.s32 %s18, 2
        // Predicated region
        $region65: #{tpu_custom_call.1} parent=63 // pred_check
          %p1148 = pneg %p194
        $region66: #{tpu_custom_call.1} parent=63 // pred_check_branch
          %1150 = sbr.rel (%p1148) target = $region68
        $region67: #{tpu_custom_call.1} parent=63 // pred_region
          %s1151 = sand.u32 %s179, 1
          %s1152 = scalar_lea.sflag [#allocation4], %s1151
          %s1153 = sand.u32 %s179, 1
          %s1154 = smul.addr %s1153, 64
          %s1155 = scalar_lea.vmem [#allocation5], %s1154
          %1156 = dma.done %s1152, 1024
        $region68: #{tpu_custom_call.1} parent=63 // pred_fallthru
          _
        // Predicated region
        $region69: #{tpu_custom_call.1} parent=63 // pred_check
          %p1157 = pneg %p220
        $region70: #{tpu_custom_call.1} parent=63 // pred_check_branch
          %1159 = sbr.rel (%p1157) target = $region72
        $region71: #{tpu_custom_call.1} parent=63 // pred_region
          %s1160 = smul.u32 2, %s29
          %p1161 = scmp.lt.s32.totalorder %s1160, 3
          %s1162 = scalar_select %p1161, %s1160, 3
          %s1163 = smul.addr %s1162, 4
          %s1164 = smul.addr %s1163, 8
          %s1165 = scalar_lea.vmem %s7, %s1164
        $region72: #{tpu_custom_call.1} parent=63 // pred_fallthru
          _
      $region64: #{tpu_custom_call.1} parent=5 // pred_fallthru
        _
    $region6: #{tpu_custom_call.1} parent=1 // loop_footer
      %s22 = sadd.s32 1, %s18
    $region7: #{tpu_custom_call.1} parent=1 // loop_footer_branch
      %17 = sbr.rel target = $region3
    $region8: #{tpu_custom_call.1} parent=1 // loop_exit
      _
    %1166 = vsyncpa [#allocation3], 1
    %s1167 = scalar_lea.sflag [#allocation3], 1
    %1168 = vsyncpa %s1167, 1
    %1169 = vsyncpa [#allocation4], 1
    %s1170 = scalar_lea.sflag [#allocation4], 1
    %1171 = vsyncpa %s1170, 1

</llo_original>
